<compile_context>
chip_gen: v7x
topology: tpu7x:2x2x1
jax: 0.10.0
libtpu: 0.0.40
codegen_flags: <defaults>
</compile_context>

<pallas_src>
import math
import functools

import jax
import jax.numpy as jnp
from jax.experimental import pallas as pl
from jax.experimental.pallas import tpu as pltpu


def _round_up(v, m):
    return ((v + m - 1) // m) * m


# ------------------------------ tiled linear -------------------------------- #

def _pick_tile(dim, candidates):
    """Largest candidate tile that divides dim; else the full dim (always legal)."""
    for c in candidates:
        if dim >= c and dim % c == 0:
            return c
    return dim


def _matmul_kernel(x_ref, w_ref, o_ref, acc_ref):
    @pl.when(pl.program_id(2) == 0)
    def _init():
        acc_ref[...] = jnp.zeros_like(acc_ref)

    acc_ref[...] += jnp.dot(x_ref[...], w_ref[...],
                            preferred_element_type=jnp.float32)

    @pl.when(pl.program_id(2) == pl.num_programs(2) - 1)
    def _store():
        o_ref[...] = acc_ref[...].astype(o_ref.dtype)


def _matmul_bias_kernel(x_ref, w_ref, b_ref, o_ref, acc_ref):
    @pl.when(pl.program_id(2) == 0)
    def _init():
        acc_ref[...] = jnp.zeros_like(acc_ref)

    acc_ref[...] += jnp.dot(x_ref[...], w_ref[...],
                            preferred_element_type=jnp.float32)

    @pl.when(pl.program_id(2) == pl.num_programs(2) - 1)
    def _store():
        o_ref[...] = (acc_ref[...] + b_ref[...].astype(jnp.float32)).astype(o_ref.dtype)


def _linear(x2d, w, b=None):
    """y = x2d @ w (+ b), tiled over (M, N_out, K) with an f32 VMEM accumulator."""
    M, K = x2d.shape
    K2, Nout = w.shape
    assert K == K2
    tm = _pick_tile(M, (512, 256, 128))
    tn = _pick_tile(Nout, (512, 256, 128))
    tk = _pick_tile(K, (1024, 512, 256, 128))
    grid = (M // tm, Nout // tn, K // tk)

    in_specs = [
        pl.BlockSpec((tm, tk), lambda i, j, k: (i, k)),
        pl.BlockSpec((tk, tn), lambda i, j, k: (k, j)),
    ]
    operands = [x2d, w]
    if b is not None:
        in_specs.append(pl.BlockSpec((1, tn), lambda i, j, k: (0, j)))
        operands.append(b.reshape(1, Nout))
        kernel = _matmul_bias_kernel
    else:
        kernel = _matmul_kernel

    return pl.pallas_call(
        kernel,
        out_shape=jax.ShapeDtypeStruct((M, Nout), x2d.dtype),
        grid=grid,
        in_specs=in_specs,
        out_specs=pl.BlockSpec((tm, tn), lambda i, j, k: (i, j)),
        scratch_shapes=[pltpu.VMEM((tm, tn), jnp.float32)],
        compiler_params=pltpu.CompilerParams(
            dimension_semantics=("parallel", "parallel", "arbitrary"),
            vmem_limit_bytes=32 * 1024 * 1024,
        ),
    )(*operands)


def _pad_rows(m):
    """Row padding target so the M axis of the matmul always tiles cleanly."""
    if m <= 128:
        return _round_up(m, 8)
    if m <= 1024:
        return _round_up(m, 128)
    return _round_up(m, 512)


def _linear_rows(x2d, w, b=None):
    """_linear with M padded to a tile-friendly multiple (pads with zero rows)."""
    M = x2d.shape[0]
    Mp = _pad_rows(M)
    if Mp != M:
        x2d = jnp.pad(x2d, ((0, Mp - M), (0, 0)))
    y = _linear(x2d, w, b)
    return y[:M] if Mp != M else y


# --------------------------- fused attention core --------------------------- #

def _attn_kernel(q_ref, k_ref, v_ref, o_ref, *, num_heads, head_dim, scale,
                 n_valid, n_pad):
    # q_ref : (tq, C)      query rows for this (batch, q-tile) step
    # k_ref : (T,  C)      keys   = [token rows (n_pad, may incl. padding) ++ prompt rows]
    # v_ref : (T,  C)      values = same row layout as keys
    # o_ref : (tq, C)      output, merged-head layout
    H, hd = num_heads, head_dim
    tq = q_ref.shape[0]
    T = k_ref.shape[0]

    # Lane-dense head groups: hd=32 -> 4 heads / 128 lanes, hd=64 -> 2 heads.
    if hd < 128 and 128 % hd == 0:
        gw, hpg = 128, 128 // hd
    else:
        gw, hpg = hd, 1
    n_groups = (H * hd) // gw

    need_mask = n_pad > n_valid
    if need_mask:
        # Valid keys: token rows [0, n_valid) and prompt rows [n_pad, T).
        key_idx = jax.lax.broadcasted_iota(jnp.int32, (tq, T), 1)
        key_ok = (key_idx < n_valid) | (key_idx >= n_pad)

    scale_c = jnp.asarray(scale, dtype=q_ref.dtype)
    dn = (((1,), (1,)), ((), ()))  # contract last dims -> no explicit k transpose

    for g in range(n_groups):          # static loop over lane-dense head groups
        lo = g * gw
        q_slab = q_ref[:, lo:lo + gw] * scale_c     # (tq, gw), compute dtype (bf16)
        k_slab = k_ref[:, lo:lo + gw]               # (T, gw)
        v_slab = v_ref[:, lo:lo + gw]               # (T, gw)
        outs = []
        for hh in range(hpg):
            a = hh * hd
            q_h = q_slab[:, a:a + hd]
            k_h = k_slab[:, a:a + hd]
            v_h = v_slab[:, a:a + hd]
            # MXU dots keep the operand dtype; f32 accumulation only.
            s = jax.lax.dot_general(q_h, k_h, dn,
                                    preferred_element_type=jnp.float32)   # (tq, T)
            if need_mask:
                s = jnp.where(key_ok, s, -1e30)
            m = jnp.max(s, axis=-1, keepdims=True)                        # f32 stats
            e = jnp.exp(s - m)
            denom = jnp.sum(e, axis=-1, keepdims=True)
            pv = jnp.dot(e.astype(v_h.dtype), v_h,
                         preferred_element_type=jnp.float32)              # (tq, hd)
            outs.append(pv * pl.reciprocal(denom, approx=True))
        blk = outs[0] if hpg == 1 else jnp.concatenate(outs, axis=-1)
        # One lane-dense, 128-aligned store per group; group temporaries die here.
        o_ref[:, lo:lo + gw] = blk.astype(o_ref.dtype)


def _seq_tiling(n):
    """(padded sequence length, q-row tile)."""
    n16 = _round_up(n, 16)
    if n16 <= 256:
        return n16, n16            # single q tile per batch
    n128 = _round_up(n, 128)
    return n128, 128               # bounded per-step VMEM (v7x) + deeper pipeline


def _attention_core(qkv_ext, *, num_heads, head_dim, scale, n_valid, n_pad, tq):
    B, n_ext, three_c = qkv_ext.shape
    C = three_c // 3
    kernel = functools.partial(_attn_kernel, num_heads=num_heads, head_dim=head_dim,
                               scale=scale, n_valid=n_valid, n_pad=n_pad)
    return pl.pallas_call(
        kernel,
        out_shape=jax.ShapeDtypeStruct((B, n_pad, C), qkv_ext.dtype),
        grid=(B, n_pad // tq),
        in_specs=[
            # q rows: (tq, C) tile at lane-block 0 of the shared qkv activation
            pl.BlockSpec((None, tq, C), lambda b, qi: (b, qi, 0)),
            # keys (tokens ++ prompts): lane-block 1, resident across the q axis
            pl.BlockSpec((None, n_ext, C), lambda b, qi: (b, 0, 1)),
            # values (tokens ++ prompts): lane-block 2
            pl.BlockSpec((None, n_ext, C), lambda b, qi: (b, 0, 2)),
        ],
        out_specs=pl.BlockSpec((None, tq, C), lambda b, qi: (b, qi, 0)),
        compiler_params=pltpu.CompilerParams(
            dimension_semantics=("parallel", "parallel"),
            vmem_limit_bytes=32 * 1024 * 1024,
        ),
    )(qkv_ext, qkv_ext, qkv_ext)


# ------------------------------ module wrapper ------------------------------ #

def attention_vk_forward(x, params, *, num_heads, layer_behind=False,
                         compute_dtype=jnp.bfloat16):
    """Forward pass of Attention_VK (eval mode, SHARE_PARAM_KV=True).

    `layer_behind` only changes the concatenation order along the key axis;
    softmax + weighted sum are permutation-invariant over keys, so the result is
    identical.  Default compute dtype is bf16 (f32 accumulation inside kernels);
    pass compute_dtype=jnp.float32 for a bit-accurate check against f32 math.
    """
    del layer_behind
    B, N, C = x.shape
    H = num_heads
    assert C % H == 0
    hd = C // H
    assert C % 128 == 0, "attention kernel expects embed dim to be a multiple of 128"
    scale = hd ** (-0.5)

    cdt = compute_dtype or x.dtype
    w_qkv = params["w_qkv"].astype(cdt)
    w_proj = params["w_proj"].astype(cdt)
    prompts = params["deep_QKV_embeddings"]           # (H, P, hd)
    P = prompts.shape[1]

    n_pad, tq = _seq_tiling(N)
    xc = x.astype(cdt)
    if n_pad != N:
        xc = jnp.pad(xc, ((0, 0), (0, n_pad - N), (0, 0)))

    # qkv linear (qkv_bias=False -> no bias operand), bf16 on the MXU, f32 accum.
    qkv = _linear_rows(xc.reshape(B * n_pad, C), w_qkv).reshape(B, n_pad, 3 * C)

    # Append the shared prompt tokens as P extra rows of the qkv activation so the
    # kernel sees them as ordinary keys/values (single score / PV dot per head).
    prom_flat = prompts.transpose(1, 0, 2).reshape(P, C).astype(cdt)      # (P, C)
    prom_rows = jnp.concatenate(
        [jnp.zeros((P, C), dtype=cdt), prom_flat, prom_flat], axis=-1)    # (P, 3C)
    prom_rows = jnp.broadcast_to(prom_rows[None], (B, P, 3 * C))
    qkv_ext = jnp.concatenate([qkv, prom_rows], axis=1)                   # (B, n_pad+P, 3C)

    # Fused MHA (QKV_proj=Identity; all dropouts identity in eval mode).
    y = _attention_core(qkv_ext, num_heads=H, head_dim=hd, scale=scale,
                        n_valid=N, n_pad=n_pad, tq=tq)                    # (B, n_pad, C)

    # Output projection (+ f32 bias added in-kernel); attention output is already
    # in merged-head (B, n_pad, C) layout, so no transpose is needed.
    y = _linear_rows(y.reshape(B * n_pad, C), w_proj, params["b_proj"])
    y = y.reshape(B, n_pad, C)[:, :N, :]
    return y.astype(x.dtype)


# --------------------------------- reference -------------------------------- #

def attention_vk_reference(x, params, *, num_heads, layer_behind=False):
    B, N, C = x.shape
    H = num_heads
    hd = C // H
    scale = hd ** (-0.5)
    qkv = x.reshape(B * N, C) @ params["w_qkv"]
    qkv = qkv.reshape(B, N, 3, H, hd).transpose(2, 0, 3, 1, 4)
    q, k, v = qkv[0], qkv[1], qkv[2]
    P = params["deep_QKV_embeddings"].shape[1]
    prom = jnp.broadcast_to(params["deep_QKV_embeddings"][None], (B, H, P, hd))
    if layer_behind:
        k = jnp.concatenate([prom, k], axis=2)
        v = jnp.concatenate([prom, v], axis=2)
    else:
        k = jnp.concatenate([k, prom], axis=2)
        v = jnp.concatenate([v, prom], axis=2)
    attn = jnp.einsum("bhnd,bhtd->bhnt", q, k) * scale
    attn = jax.nn.softmax(attn, axis=-1)
    y = jnp.einsum("bhnt,bhtd->bhnd", attn, v)
    y = y.transpose(0, 2, 1, 3).reshape(B, N, C)
    y = y.reshape(B * N, C) @ params["w_proj"] + params["b_proj"]
    return y.reshape(B, N, C)


# ----------------------------------- main ------------------------------------ #

def init_params(key, C, H, P):
    hd = C // H
    k1, k2, k3, k4 = jax.random.split(key, 4)
    # torch nn.Linear default init: U(-1/sqrt(fan_in), 1/sqrt(fan_in))
    bound = 1.0 / math.sqrt(C)
    w_qkv_torch = jax.random.uniform(k1, (3 * C, C), jnp.float32, -bound, bound)
    w_proj_torch = jax.random.uniform(k2, (C, C), jnp.float32, -bound, bound)
    b_proj = jax.random.uniform(k3, (C,), jnp.float32, -bound, bound)
    # kaiming_uniform(a=0, fan_in) on (H, P, hd): fan_in = P*hd
    fan_in = P * hd
    kb = math.sqrt(2.0) * math.sqrt(3.0 / fan_in)
    prompts = jax.random.uniform(k4, (H, P, hd), jnp.float32, -kb, kb)
    return {
        "w_qkv": w_qkv_torch.T,          # (C, 3C), used as x @ W
        "w_proj": w_proj_torch.T,        # (C, C)
        "b_proj": b_proj,                # (C,)
        "deep_QKV_embeddings": prompts,  # (H, P, hd)
    }


if __name__ == "__main__":
    B, N, C = 2, 16, 128
    num_heads = 4
    num_tokens = 8  # p_vk_cfg.NUM_TOKENS

    key = jax.random.PRNGKey(0)
    kp, kx = jax.random.split(key)
    params = init_params(kp, C, num_heads, num_tokens)
    x = jax.random.normal(kx, (B, N, C), jnp.float32)

    ref = attention_vk_reference(x, params, num_heads=num_heads, layer_behind=False)

    # 1) f32 compute path: validates kernel math tightly (approx recip only).
    fwd_f32 = jax.jit(functools.partial(attention_vk_forward, num_heads=num_heads,
                                        compute_dtype=jnp.float32))
    out_f32 = jax.block_until_ready(fwd_f32(x, params))
    assert out_f32.shape == (B, N, C)
    assert jnp.allclose(out_f32, ref, atol=2e-3, rtol=2e-3), "f32 path mismatch vs reference"

    # 2) default bf16 compute path (perf configuration): looser tolerance.
    fwd_bf16 = jax.jit(functools.partial(attention_vk_forward, num_heads=num_heads))
    out_bf16 = jax.block_until_ready(fwd_bf16(x, params))
    assert out_bf16.shape == (B, N, C)
    assert jnp.allclose(out_bf16, ref, atol=3e-2, rtol=3e-2), "bf16 path mismatch vs reference"

    print("KERNEL_OK")
</pallas_src>

<mosaic_0001>
module attributes {stable_mosaic.version = 11 : i64} {
  func.func @_attn_kernel(%arg0: i32, %arg1: i32, %arg2: memref<1x16x128xf32, #tpu.memory_space<vmem>>, %arg3: memref<1x24x128xf32, #tpu.memory_space<vmem>>, %arg4: memref<1x24x128xf32, #tpu.memory_space<vmem>>, %arg5: memref<1x16x128xf32, #tpu.memory_space<vmem>>) attributes {dimension_semantics = [#tpu.dimension_semantics<parallel>, #tpu.dimension_semantics<parallel>], iteration_bounds = array<i64: 2, 1>, scalar_prefetch = 0 : i64, scratch_operands = 0 : i64, tpu.core_type = #tpu.core_type<tc>, window_params = [{transform_indices = @transform_0, window_bounds = array<i64: 1, 16, 128>}, {transform_indices = @transform_1, window_bounds = array<i64: 1, 24, 128>}, {transform_indices = @transform_2, window_bounds = array<i64: 1, 24, 128>}, {transform_indices = @transform_3, window_bounds = array<i64: 1, 16, 128>}]} {
    %c0 = arith.constant 0 : index
    %c0_0 = arith.constant 0 : index
    %c0_1 = arith.constant 0 : index
    %0 = vector.load %arg2[%c0, %c0_0, %c0_1] : memref<1x16x128xf32, #tpu.memory_space<vmem>>, vector<1x16x128xf32>
    %1 = vector.shape_cast %0 : vector<1x16x128xf32> to vector<16x128xf32>
    %cst = arith.constant 0.176776692 : f32
    %2 = vector.broadcast %cst : f32 to vector<16x128xf32>
    %3 = arith.mulf %1, %2 : vector<16x128xf32>
    %c0_2 = arith.constant 0 : index
    %c0_3 = arith.constant 0 : index
    %c0_4 = arith.constant 0 : index
    %4 = vector.load %arg3[%c0_2, %c0_3, %c0_4] : memref<1x24x128xf32, #tpu.memory_space<vmem>>, vector<1x24x128xf32>
    %5 = vector.shape_cast %4 : vector<1x24x128xf32> to vector<24x128xf32>
    %c0_5 = arith.constant 0 : index
    %c0_6 = arith.constant 0 : index
    %c0_7 = arith.constant 0 : index
    %6 = vector.load %arg4[%c0_5, %c0_6, %c0_7] : memref<1x24x128xf32, #tpu.memory_space<vmem>>, vector<1x24x128xf32>
    %7 = vector.shape_cast %6 : vector<1x24x128xf32> to vector<24x128xf32>
    %8 = vector.extract_strided_slice %3 {offsets = [0, 0], sizes = [16, 32], strides = [1, 1]} : vector<16x128xf32> to vector<16x32xf32>
    %9 = vector.extract_strided_slice %5 {offsets = [0, 0], sizes = [24, 32], strides = [1, 1]} : vector<24x128xf32> to vector<24x32xf32>
    %10 = vector.extract_strided_slice %7 {offsets = [0, 0], sizes = [24, 32], strides = [1, 1]} : vector<24x128xf32> to vector<24x32xf32>
    %cst_8 = arith.constant dense<0.000000e+00> : vector<16x24xf32>
    %11 = tpu.matmul %8, %9, %cst_8 {dimension_numbers = #tpu.dot_dimension_numbers<[1], [1], [0], [0], [0, 0, 1, 0], [], []>} : vector<16x32xf32>, vector<24x32xf32>, vector<16x24xf32> -> vector<16x24xf32>
    %cst_9 = arith.constant dense<0xFF800000> : vector<16xf32>
    %12 = vector.multi_reduction <maximumf>, %11, %cst_9 [1] : vector<16x24xf32> to vector<16xf32>
    %13 = vector.shape_cast %12 : vector<16xf32> to vector<16x1xf32>
    %14 = vector.broadcast %13 : vector<16x1xf32> to vector<16x24xf32>
    %15 = arith.subf %11, %14 : vector<16x24xf32>
    %16 = math.exp %15 : vector<16x24xf32>
    %cst_10 = arith.constant dense<0.000000e+00> : vector<16xf32>
    %17 = vector.multi_reduction <add>, %16, %cst_10 [1] : vector<16x24xf32> to vector<16xf32>
    %18 = vector.shape_cast %17 : vector<16xf32> to vector<16x1xf32>
    %cst_11 = arith.constant dense<0.000000e+00> : vector<16x32xf32>
    %19 = tpu.matmul %16, %10, %cst_11 {dimension_numbers = #tpu.dot_dimension_numbers<[1], [0], [0], [1], [0, 0, 1, 1], [], []>} : vector<16x24xf32>, vector<24x32xf32>, vector<16x32xf32> -> vector<16x32xf32>
    %20 = tpu.reciprocal %18 {approx = true} : vector<16x1xf32> -> vector<16x1xf32>
    %21 = vector.broadcast %20 : vector<16x1xf32> to vector<16x32xf32>
    %22 = arith.mulf %19, %21 : vector<16x32xf32>
    %23 = vector.extract_strided_slice %3 {offsets = [0, 32], sizes = [16, 32], strides = [1, 1]} : vector<16x128xf32> to vector<16x32xf32>
    %24 = vector.extract_strided_slice %5 {offsets = [0, 32], sizes = [24, 32], strides = [1, 1]} : vector<24x128xf32> to vector<24x32xf32>
    %25 = vector.extract_strided_slice %7 {offsets = [0, 32], sizes = [24, 32], strides = [1, 1]} : vector<24x128xf32> to vector<24x32xf32>
    %cst_12 = arith.constant dense<0.000000e+00> : vector<16x24xf32>
    %26 = tpu.matmul %23, %24, %cst_12 {dimension_numbers = #tpu.dot_dimension_numbers<[1], [1], [0], [0], [0, 0, 1, 0], [], []>} : vector<16x32xf32>, vector<24x32xf32>, vector<16x24xf32> -> vector<16x24xf32>
    %cst_13 = arith.constant dense<0xFF800000> : vector<16xf32>
    %27 = vector.multi_reduction <maximumf>, %26, %cst_13 [1] : vector<16x24xf32> to vector<16xf32>
    %28 = vector.shape_cast %27 : vector<16xf32> to vector<16x1xf32>
    %29 = vector.broadcast %28 : vector<16x1xf32> to vector<16x24xf32>
    %30 = arith.subf %26, %29 : vector<16x24xf32>
    %31 = math.exp %30 : vector<16x24xf32>
    %cst_14 = arith.constant dense<0.000000e+00> : vector<16xf32>
    %32 = vector.multi_reduction <add>, %31, %cst_14 [1] : vector<16x24xf32> to vector<16xf32>
    %33 = vector.shape_cast %32 : vector<16xf32> to vector<16x1xf32>
    %cst_15 = arith.constant dense<0.000000e+00> : vector<16x32xf32>
    %34 = tpu.matmul %31, %25, %cst_15 {dimension_numbers = #tpu.dot_dimension_numbers<[1], [0], [0], [1], [0, 0, 1, 1], [], []>} : vector<16x24xf32>, vector<24x32xf32>, vector<16x32xf32> -> vector<16x32xf32>
    %35 = tpu.reciprocal %33 {approx = true} : vector<16x1xf32> -> vector<16x1xf32>
    %36 = vector.broadcast %35 : vector<16x1xf32> to vector<16x32xf32>
    %37 = arith.mulf %34, %36 : vector<16x32xf32>
    %38 = vector.extract_strided_slice %3 {offsets = [0, 64], sizes = [16, 32], strides = [1, 1]} : vector<16x128xf32> to vector<16x32xf32>
    %39 = vector.extract_strided_slice %5 {offsets = [0, 64], sizes = [24, 32], strides = [1, 1]} : vector<24x128xf32> to vector<24x32xf32>
    %40 = vector.extract_strided_slice %7 {offsets = [0, 64], sizes = [24, 32], strides = [1, 1]} : vector<24x128xf32> to vector<24x32xf32>
    %cst_16 = arith.constant dense<0.000000e+00> : vector<16x24xf32>
    %41 = tpu.matmul %38, %39, %cst_16 {dimension_numbers = #tpu.dot_dimension_numbers<[1], [1], [0], [0], [0, 0, 1, 0], [], []>} : vector<16x32xf32>, vector<24x32xf32>, vector<16x24xf32> -> vector<16x24xf32>
    %cst_17 = arith.constant dense<0xFF800000> : vector<16xf32>
    %42 = vector.multi_reduction <maximumf>, %41, %cst_17 [1] : vector<16x24xf32> to vector<16xf32>
    %43 = vector.shape_cast %42 : vector<16xf32> to vector<16x1xf32>
    %44 = vector.broadcast %43 : vector<16x1xf32> to vector<16x24xf32>
    %45 = arith.subf %41, %44 : vector<16x24xf32>
    %46 = math.exp %45 : vector<16x24xf32>
    %cst_18 = arith.constant dense<0.000000e+00> : vector<16xf32>
    %47 = vector.multi_reduction <add>, %46, %cst_18 [1] : vector<16x24xf32> to vector<16xf32>
    %48 = vector.shape_cast %47 : vector<16xf32> to vector<16x1xf32>
    %cst_19 = arith.constant dense<0.000000e+00> : vector<16x32xf32>
    %49 = tpu.matmul %46, %40, %cst_19 {dimension_numbers = #tpu.dot_dimension_numbers<[1], [0], [0], [1], [0, 0, 1, 1], [], []>} : vector<16x24xf32>, vector<24x32xf32>, vector<16x32xf32> -> vector<16x32xf32>
    %50 = tpu.reciprocal %48 {approx = true} : vector<16x1xf32> -> vector<16x1xf32>
    %51 = vector.broadcast %50 : vector<16x1xf32> to vector<16x32xf32>
    %52 = arith.mulf %49, %51 : vector<16x32xf32>
    %53 = vector.extract_strided_slice %3 {offsets = [0, 96], sizes = [16, 32], strides = [1, 1]} : vector<16x128xf32> to vector<16x32xf32>
    %54 = vector.extract_strided_slice %5 {offsets = [0, 96], sizes = [24, 32], strides = [1, 1]} : vector<24x128xf32> to vector<24x32xf32>
    %55 = vector.extract_strided_slice %7 {offsets = [0, 96], sizes = [24, 32], strides = [1, 1]} : vector<24x128xf32> to vector<24x32xf32>
    %cst_20 = arith.constant dense<0.000000e+00> : vector<16x24xf32>
    %56 = tpu.matmul %53, %54, %cst_20 {dimension_numbers = #tpu.dot_dimension_numbers<[1], [1], [0], [0], [0, 0, 1, 0], [], []>} : vector<16x32xf32>, vector<24x32xf32>, vector<16x24xf32> -> vector<16x24xf32>
    %cst_21 = arith.constant dense<0xFF800000> : vector<16xf32>
    %57 = vector.multi_reduction <maximumf>, %56, %cst_21 [1] : vector<16x24xf32> to vector<16xf32>
    %58 = vector.shape_cast %57 : vector<16xf32> to vector<16x1xf32>
    %59 = vector.broadcast %58 : vector<16x1xf32> to vector<16x24xf32>
    %60 = arith.subf %56, %59 : vector<16x24xf32>
    %61 = math.exp %60 : vector<16x24xf32>
    %cst_22 = arith.constant dense<0.000000e+00> : vector<16xf32>
    %62 = vector.multi_reduction <add>, %61, %cst_22 [1] : vector<16x24xf32> to vector<16xf32>
    %63 = vector.shape_cast %62 : vector<16xf32> to vector<16x1xf32>
    %cst_23 = arith.constant dense<0.000000e+00> : vector<16x32xf32>
    %64 = tpu.matmul %61, %55, %cst_23 {dimension_numbers = #tpu.dot_dimension_numbers<[1], [0], [0], [1], [0, 0, 1, 1], [], []>} : vector<16x24xf32>, vector<24x32xf32>, vector<16x32xf32> -> vector<16x32xf32>
    %65 = tpu.reciprocal %63 {approx = true} : vector<16x1xf32> -> vector<16x1xf32>
    %66 = vector.broadcast %65 : vector<16x1xf32> to vector<16x32xf32>
    %67 = arith.mulf %64, %66 : vector<16x32xf32>
    %68 = tpu.concatenate %22, %37, %52, %67 in 1 : vector<16x32xf32>, vector<16x32xf32>, vector<16x32xf32>, vector<16x32xf32> -> vector<16x128xf32>
    %c0_24 = arith.constant 0 : index
    %c0_25 = arith.constant 0 : index
    %c0_26 = arith.constant 0 : index
    %69 = vector.load %arg5[%c0_24, %c0_25, %c0_26] : memref<1x16x128xf32, #tpu.memory_space<vmem>>, vector<1x16x128xf32>
    %70 = vector.shape_cast %69 : vector<1x16x128xf32> to vector<16x128xf32>
    %71 = vector.shape_cast %68 : vector<16x128xf32> to vector<1x16x128xf32>
    tpu.vector_store %arg5[%c0_24, %c0_25, %c0_26], %71 {strides = array<i32>} : memref<1x16x128xf32, #tpu.memory_space<vmem>>, vector<1x16x128xf32>,
    return
  }
  func.func @transform_0(%arg0: i32, %arg1: i32) -> (i32, i32, i32) {
    %c0_i32 = arith.constant 0 : i32
    %c0_i32_0 = arith.constant 0 : i32
    return %arg0, %arg1, %c0_i32 : i32, i32, i32
  }
  func.func @transform_1(%arg0: i32, %arg1: i32) -> (i32, i32, i32) {
    %c0_i32 = arith.constant 0 : i32
    %c1_i32 = arith.constant 1 : i32
    %c0_i32_0 = arith.constant 0 : i32
    return %arg0, %c0_i32, %c1_i32 : i32, i32, i32
  }
  func.func @transform_2(%arg0: i32, %arg1: i32) -> (i32, i32, i32) {
    %c0_i32 = arith.constant 0 : i32
    %c2_i32 = arith.constant 2 : i32
    %c0_i32_0 = arith.constant 0 : i32
    return %arg0, %c0_i32, %c2_i32 : i32, i32, i32
  }
  func.func @transform_3(%arg0: i32, %arg1: i32) -> (i32, i32, i32) {
    %c0_i32 = arith.constant 0 : i32
    %c0_i32_0 = arith.constant 0 : i32
    return %arg0, %arg1, %c0_i32 : i32, i32, i32
  }
}

module attributes {stable_mosaic.version = 11 : i64} {
  func.func @_matmul_kernel(%arg0: i32, %arg1: i32, %arg2: i32, %arg3: memref<32x128xf32, #tpu.memory_space<vmem>>, %arg4: memref<128x128xf32, #tpu.memory_space<vmem>>, %arg5: memref<32x128xf32, #tpu.memory_space<vmem>>, %arg6: memref<32x128xf32, #tpu.memory_space<vmem>>) attributes {dimension_semantics = [#tpu.dimension_semantics<parallel>, #tpu.dimension_semantics<parallel>, #tpu.dimension_semantics<arbitrary>], iteration_bounds = array<i64: 1, 3, 1>, scalar_prefetch = 0 : i64, scratch_operands = 1 : i64, tpu.core_type = #tpu.core_type<tc>, window_params = [{transform_indices = @transform_0, window_bounds = array<i64: 32, 128>}, {transform_indices = @transform_1, window_bounds = array<i64: 128, 128>}, {transform_indices = @transform_2, window_bounds = array<i64: 32, 128>}]} {
    %c0_i32 = arith.constant 0 : i32
    %0 = arith.cmpi eq, %arg2, %c0_i32 : i32
    %1 = arith.extui %0 : i1 to i32
    %c0_i32_0 = arith.constant 0 : i32
    %2 = arith.cmpi ne, %1, %c0_i32_0 : i32
    scf.if %2 {
      %cst_10 = arith.constant 0.000000e+00 : f32
      %12 = vector.broadcast %cst_10 : f32 to vector<32x128xf32>
      %c0_11 = arith.constant 0 : index
      %c0_12 = arith.constant 0 : index
      %13 = vector.load %arg6[%c0_11, %c0_12] : memref<32x128xf32, #tpu.memory_space<vmem>>, vector<32x128xf32>
      tpu.vector_store %arg6[%c0_11, %c0_12], %12 {strides = array<i32>} : memref<32x128xf32, #tpu.memory_space<vmem>>, vector<32x128xf32>,
    } else {
    }
    %c0 = arith.constant 0 : index
    %c0_1 = arith.constant 0 : index
    %3 = vector.load %arg6[%c0, %c0_1] : memref<32x128xf32, #tpu.memory_space<vmem>>, vector<32x128xf32>
    %c0_2 = arith.constant 0 : index
    %c0_3 = arith.constant 0 : index
    %4 = vector.load %arg3[%c0_2, %c0_3] : memref<32x128xf32, #tpu.memory_space<vmem>>, vector<32x128xf32>
    %c0_4 = arith.constant 0 : index
    %c0_5 = arith.constant 0 : index
    %5 = vector.load %arg4[%c0_4, %c0_5] : memref<128x128xf32, #tpu.memory_space<vmem>>, vector<128x128xf32>
    %cst = arith.constant dense<0.000000e+00> : vector<32x128xf32>
    %6 = tpu.matmul %4, %5, %cst {dimension_numbers = #tpu.dot_dimension_numbers<[1], [0], [0], [1], [0, 0, 1, 1], [], []>} : vector<32x128xf32>, vector<128x128xf32>, vector<32x128xf32> -> vector<32x128xf32>
    %7 = arith.addf %3, %6 : vector<32x128xf32>
    %c0_6 = arith.constant 0 : index
    %c0_7 = arith.constant 0 : index
    %8 = vector.load %arg6[%c0_6, %c0_7] : memref<32x128xf32, #tpu.memory_space<vmem>>, vector<32x128xf32>
    tpu.vector_store %arg6[%c0_6, %c0_7], %7 {strides = array<i32>} : memref<32x128xf32, #tpu.memory_space<vmem>>, vector<32x128xf32>,
    %c0_i32_8 = arith.constant 0 : i32
    %9 = arith.cmpi eq, %arg2, %c0_i32_8 : i32
    %10 = arith.extui %9 : i1 to i32
    %c0_i32_9 = arith.constant 0 : i32
    %11 = arith.cmpi ne, %10, %c0_i32_9 : i32
    scf.if %11 {
      %c0_10 = arith.constant 0 : index
      %c0_11 = arith.constant 0 : index
      %12 = vector.load %arg6[%c0_10, %c0_11] : memref<32x128xf32, #tpu.memory_space<vmem>>, vector<32x128xf32>
      %c0_12 = arith.constant 0 : index
      %c0_13 = arith.constant 0 : index
      %13 = vector.load %arg5[%c0_12, %c0_13] : memref<32x128xf32, #tpu.memory_space<vmem>>, vector<32x128xf32>
      tpu.vector_store %arg5[%c0_12, %c0_13], %12 {strides = array<i32>} : memref<32x128xf32, #tpu.memory_space<vmem>>, vector<32x128xf32>,
    } else {
    }
    return
  }
  func.func @transform_0(%arg0: i32, %arg1: i32, %arg2: i32) -> (i32, i32) {
    %c0_i32 = arith.constant 0 : i32
    return %arg0, %arg2 : i32, i32
  }
  func.func @transform_1(%arg0: i32, %arg1: i32, %arg2: i32) -> (i32, i32) {
    %c0_i32 = arith.constant 0 : i32
    return %arg2, %arg1 : i32, i32
  }
  func.func @transform_2(%arg0: i32, %arg1: i32, %arg2: i32) -> (i32, i32) {
    %c0_i32 = arith.constant 0 : i32
    return %arg0, %arg1 : i32, i32
  }
}

module attributes {stable_mosaic.version = 11 : i64} {
  func.func @_matmul_bias_kernel(%arg0: i32, %arg1: i32, %arg2: i32, %arg3: memref<32x128xf32, #tpu.memory_space<vmem>>, %arg4: memref<128x128xf32, #tpu.memory_space<vmem>>, %arg5: memref<1x128xf32, #tpu.memory_space<vmem>>, %arg6: memref<32x128xf32, #tpu.memory_space<vmem>>, %arg7: memref<32x128xf32, #tpu.memory_space<vmem>>) attributes {dimension_semantics = [#tpu.dimension_semantics<parallel>, #tpu.dimension_semantics<parallel>, #tpu.dimension_semantics<arbitrary>], iteration_bounds = array<i64: 1, 1, 1>, scalar_prefetch = 0 : i64, scratch_operands = 1 : i64, tpu.core_type = #tpu.core_type<tc>, window_params = [{transform_indices = @transform_0, window_bounds = array<i64: 32, 128>}, {transform_indices = @transform_1, window_bounds = array<i64: 128, 128>}, {transform_indices = @transform_2, window_bounds = array<i64: 1, 128>}, {transform_indices = @transform_3, window_bounds = array<i64: 32, 128>}]} {
    %c0_i32 = arith.constant 0 : i32
    %0 = arith.cmpi eq, %arg2, %c0_i32 : i32
    %1 = arith.extui %0 : i1 to i32
    %c0_i32_0 = arith.constant 0 : i32
    %2 = arith.cmpi ne, %1, %c0_i32_0 : i32
    scf.if %2 {
      %cst_10 = arith.constant 0.000000e+00 : f32
      %12 = vector.broadcast %cst_10 : f32 to vector<32x128xf32>
      %c0_11 = arith.constant 0 : index
      %c0_12 = arith.constant 0 : index
      %13 = vector.load %arg7[%c0_11, %c0_12] : memref<32x128xf32, #tpu.memory_space<vmem>>, vector<32x128xf32>
      tpu.vector_store %arg7[%c0_11, %c0_12], %12 {strides = array<i32>} : memref<32x128xf32, #tpu.memory_space<vmem>>, vector<32x128xf32>,
    } else {
    }
    %c0 = arith.constant 0 : index
    %c0_1 = arith.constant 0 : index
    %3 = vector.load %arg7[%c0, %c0_1] : memref<32x128xf32, #tpu.memory_space<vmem>>, vector<32x128xf32>
    %c0_2 = arith.constant 0 : index
    %c0_3 = arith.constant 0 : index
    %4 = vector.load %arg3[%c0_2, %c0_3] : memref<32x128xf32, #tpu.memory_space<vmem>>, vector<32x128xf32>
    %c0_4 = arith.constant 0 : index
    %c0_5 = arith.constant 0 : index
    %5 = vector.load %arg4[%c0_4, %c0_5] : memref<128x128xf32, #tpu.memory_space<vmem>>, vector<128x128xf32>
    %cst = arith.constant dense<0.000000e+00> : vector<32x128xf32>
    %6 = tpu.matmul %4, %5, %cst {dimension_numbers = #tpu.dot_dimension_numbers<[1], [0], [0], [1], [0, 0, 1, 1], [], []>} : vector<32x128xf32>, vector<128x128xf32>, vector<32x128xf32> -> vector<32x128xf32>
    %7 = arith.addf %3, %6 : vector<32x128xf32>
    %c0_6 = arith.constant 0 : index
    %c0_7 = arith.constant 0 : index
    %8 = vector.load %arg7[%c0_6, %c0_7] : memref<32x128xf32, #tpu.memory_space<vmem>>, vector<32x128xf32>
    tpu.vector_store %arg7[%c0_6, %c0_7], %7 {strides = array<i32>} : memref<32x128xf32, #tpu.memory_space<vmem>>, vector<32x128xf32>,
    %c0_i32_8 = arith.constant 0 : i32
    %9 = arith.cmpi eq, %arg2, %c0_i32_8 : i32
    %10 = arith.extui %9 : i1 to i32
    %c0_i32_9 = arith.constant 0 : i32
    %11 = arith.cmpi ne, %10, %c0_i32_9 : i32
    scf.if %11 {
      %c0_10 = arith.constant 0 : index
      %c0_11 = arith.constant 0 : index
      %12 = vector.load %arg7[%c0_10, %c0_11] : memref<32x128xf32, #tpu.memory_space<vmem>>, vector<32x128xf32>
      %c0_12 = arith.constant 0 : index
      %c0_13 = arith.constant 0 : index
      %13 = vector.load %arg5[%c0_12, %c0_13] : memref<1x128xf32, #tpu.memory_space<vmem>>, vector<1x128xf32>
      %14 = vector.broadcast %13 : vector<1x128xf32> to vector<32x128xf32>
      %15 = arith.addf %12, %14 : vector<32x128xf32>
      %c0_14 = arith.constant 0 : index
      %c0_15 = arith.constant 0 : index
      %16 = vector.load %arg6[%c0_14, %c0_15] : memref<32x128xf32, #tpu.memory_space<vmem>>, vector<32x128xf32>
      tpu.vector_store %arg6[%c0_14, %c0_15], %15 {strides = array<i32>} : memref<32x128xf32, #tpu.memory_space<vmem>>, vector<32x128xf32>,
    } else {
    }
    return
  }
  func.func @transform_0(%arg0: i32, %arg1: i32, %arg2: i32) -> (i32, i32) {
    %c0_i32 = arith.constant 0 : i32
    return %arg0, %arg2 : i32, i32
  }
  func.func @transform_1(%arg0: i32, %arg1: i32, %arg2: i32) -> (i32, i32) {
    %c0_i32 = arith.constant 0 : i32
    return %arg2, %arg1 : i32, i32
  }
  func.func @transform_2(%arg0: i32, %arg1: i32, %arg2: i32) -> (i32, i32) {
    %c0_i32 = arith.constant 0 : i32
    %c0_i32_0 = arith.constant 0 : i32
    return %c0_i32, %arg1 : i32, i32
  }
  func.func @transform_3(%arg0: i32, %arg1: i32, %arg2: i32) -> (i32, i32) {
    %c0_i32 = arith.constant 0 : i32
    return %arg0, %arg1 : i32, i32
  }
}

</mosaic_0001>

<llo_original>
// kernel: attention_vk_forward.3
$region0: #{attention_vk_forward.3}
  #allocation0 [shape = 'u32[]', space=smem, size = 0x4, offset = 0x4, fixed_abs, tag = 'smem constant byte address 0x4 - core index']
  #allocation1 [shape = 'u32[144,128]{1,0:T(1,128)}', space=vmem, size = 0x12000, scoped, tag = 'internal scratch']
  #allocation2 [shape = 'f32[32,128]{1,0:T(8,128)}', space=vmem, size = 0x4000, scoped, tag = 'scratch operand']
  %s0 = inlined_call_operand.vmem [shape: f32[32,128], index: 0, kind: input, shape index: {}]
  %s1 = inlined_call_operand.hbm [shape: f32[128,384], index: 1, kind: input, shape index: {}]
  %s2 = inlined_call_operand.vmem [shape: f32[32,384], index: 2, kind: output, shape index: {}]
  %s3 = sld [smem:[#allocation0]]
  $region87: #{attention_vk_forward.3} parent=0
    _
  %s5 = ssub.s32 1, %s3
  %s6 = scalar_select 0, %s5, %s3
  $region1: #{attention_vk_forward.3} parent=0
    #allocation3 [shape = 'u8[131072]{0}', space=vmem, size = 0x20000, scoped, tag = 'input window, operand 1']
    #allocation4 [shape = 's32[2]{0}', space=sflag, size = 0x8, scoped, tag = 'scoped memory for attention_vk_forward.3']
    #allocation5 [shape = 'u8[32768]{0}', space=vmem, size = 0x8000, scoped, tag = 'output window, operand 0']
    %7 = vsyncpa [#allocation4], 0
    %s8 = scalar_lea.sflag [#allocation4], 1
    %9 = vsyncpa %s8, 0
    loop: start=0, step=1, limit=5
    $region2: #{attention_vk_forward.3} parent=1 // loop_pre_header
      _
    $region3: #{attention_vk_forward.3} parent=1 // loop_header
      %s11 = sphi 0, %s15
      %p12 = scmp.ge.s32.totalorder %s11, 5
      %s18 = sphi 0, %s37
      %s19 = sphi 0, %s33
      %s20 = sphi 0, %s29
      %s21 = sphi 0, %s18
      %s22 = sphi 0, %s19
      %s23 = sphi 0, %s20
      %s24 = sphi 0, %s21
      %s25 = sphi 0, %s22
      %s26 = sphi 0, %s23
      %s42 = sphi 0, %s44
      %s45 = sphi 0, %s42
      %s46 = sphi 0, %s45
      %s62 = sphi 0, %s46
      %s70 = sphi 0, %s72
      %s73 = sphi 0, %s70
      %s74 = sphi 0, %s73
      %s90 = sphi 0, %s74
      %s98 = sphi 0, %s100
      %s101 = sphi 0, %s98
      %s102 = sphi 0, %s101
      %s118 = sphi 0, %s102
    $region4: #{attention_vk_forward.3} parent=1 // loop_header_branch
      %14 = sbr.rel (%p12) target = $region8
    $region5: #{attention_vk_forward.3} parent=1 // loop_body
      %s16 = ssub.s32 %s11, 1
      %s17 = ssub.s32 %s11, 2
      %s27 = sadd.s32 1, %s20
      %p28 = scmp.ge.s32.totalorder %s27, 1
      %s29 = scalar_select %p28, 0, %s27
      %s30 = sadd.s32 1, %s19
      %s31 = scalar_select %p28, %s30, %s19
      %p32 = scmp.ge.s32.totalorder %s31, 3
      %s33 = scalar_select %p32, 0, %s31
      %s34 = sadd.s32 1, %s18
      %s35 = scalar_select %p32, %s34, %s18
      %p36 = scmp.ge.s32.totalorder %s35, 1
      %s37 = scalar_select %p36, 0, %s35
      %s38 = ssub.s32 %s18, %s37
      %s39 = ssub.s32 %s20, %s29
      %s40 = sor.u32 %s38, %s39
      %p41 = scmp.eq.s32.totalorder %s40, 0
      %s43 = sadd.s32 %s42, 1
      %s44 = scalar_select %p41, %s42, %s43
      %p47 = pneg %p41
      %p48 = scmp.eq.s32.totalorder %s11, 2
      %p49 = por %p47, %p48
      %p50 = scmp.ne.s32.totalorder %s42, %s45
      %p51 = scmp.eq.s32.totalorder %s11, 0
      %p52 = por %p50, %p51
      %p53 = scmp.ne.s32.totalorder %s42, %s45
      %p54 = scmp.eq.s32.totalorder %s16, 2
      %p55 = por %p53, %p54
      %p56 = scmp.ne.s32.totalorder %s45, %s46
      %p57 = scmp.eq.s32.totalorder %s16, 0
      %p58 = por %p56, %p57
      %p59 = scmp.ne.s32.totalorder %s45, %s46
      %p60 = scmp.eq.s32.totalorder %s17, 2
      %p61 = por %p59, %p60
      %p63 = scmp.ne.s32.totalorder %s46, %s62
      %p64 = scmp.eq.s32.totalorder %s17, 0
      %p65 = por %p63, %p64
      %s66 = ssub.s32 %s20, %s29
      %s67 = ssub.s32 %s19, %s33
      %s68 = sor.u32 %s66, %s67
      %p69 = scmp.eq.s32.totalorder %s68, 0
      %s71 = sadd.s32 %s70, 1
      %s72 = scalar_select %p69, %s70, %s71
      %p75 = pneg %p69
      %p76 = scmp.eq.s32.totalorder %s11, 2
      %p77 = por %p75, %p76
      %p78 = scmp.ne.s32.totalorder %s70, %s73
      %p79 = scmp.eq.s32.totalorder %s11, 0
      %p80 = por %p78, %p79
      %p81 = scmp.ne.s32.totalorder %s70, %s73
      %p82 = scmp.eq.s32.totalorder %s16, 2
      %p83 = por %p81, %p82
      %p84 = scmp.ne.s32.totalorder %s73, %s74
      %p85 = scmp.eq.s32.totalorder %s16, 0
      %p86 = por %p84, %p85
      %p87 = scmp.ne.s32.totalorder %s73, %s74
      %p88 = scmp.eq.s32.totalorder %s17, 2
      %p89 = por %p87, %p88
      %p91 = scmp.ne.s32.totalorder %s74, %s90
      %p92 = scmp.eq.s32.totalorder %s17, 0
      %p93 = por %p91, %p92
      %s94 = ssub.s32 %s18, %s37
      %s95 = ssub.s32 %s19, %s33
      %s96 = sor.u32 %s94, %s95
      %p97 = scmp.eq.s32.totalorder %s96, 0
      %s99 = sadd.s32 %s98, 1
      %s100 = scalar_select %p97, %s98, %s99
      %p103 = pneg %p97
      %p104 = scmp.eq.s32.totalorder %s11, 2
      %p105 = por %p103, %p104
      %p106 = scmp.ne.s32.totalorder %s98, %s101
      %p107 = scmp.eq.s32.totalorder %s11, 0
      %p108 = por %p106, %p107
      %p109 = scmp.ne.s32.totalorder %s98, %s101
      %p110 = scmp.eq.s32.totalorder %s16, 2
      %p111 = por %p109, %p110
      %p112 = scmp.ne.s32.totalorder %s101, %s102
      %p113 = scmp.eq.s32.totalorder %s16, 0
      %p114 = por %p112, %p113
      %p115 = scmp.ne.s32.totalorder %s101, %s102
      %p116 = scmp.eq.s32.totalorder %s17, 2
      %p117 = por %p115, %p116
      %p119 = scmp.ne.s32.totalorder %s102, %s118
      %p120 = scmp.eq.s32.totalorder %s17, 0
      %p121 = por %p119, %p120
      %p122 = scmp.le.s32.totalorder 1, %s11
      %p123 = scmp.lt.s32.totalorder %s11, 4
      %p124 = pnand %p122, %p123
      %p125 = pneg %p124
      // Predicated region
      $region9: #{attention_vk_forward.3} parent=5 // pred_check
        _
      $region10: #{attention_vk_forward.3} parent=5 // pred_check_branch
        %127 = sbr.rel (%p124) target = $region12
      $region11: #{attention_vk_forward.3} parent=5 // pred_region
        %s128 = ssub.s32 %s11, 1
        // Predicated region
        $region13: #{attention_vk_forward.3} parent=11 // pred_check
          %p129 = pneg %p58
        $region14: #{attention_vk_forward.3} parent=11 // pred_check_branch
          %131 = sbr.rel (%p129) target = $region16
        $region15: #{attention_vk_forward.3} parent=11 // pred_region
          %s132 = smul.u32 4, %s21
          %p133 = scmp.lt.s32.totalorder %s132, 3
          %s134 = scalar_select %p133, %s132, 3
          %p135 = scmp.lt.s32.totalorder %s23, 0
          %s136 = scalar_select %p135, %s23, 0
          %s137 = sadd.s32 %s136, %s134
          %s138 = smul.addr %s137, 8
          %s139 = scalar_lea.vmem %s0, %s138
          %s140 = smul.u32 4, %s21
        $region16: #{attention_vk_forward.3} parent=11 // pred_fallthru
          _
      $region12: #{attention_vk_forward.3} parent=5 // pred_fallthru
        _
      %p141 = scmp.lt.s32.totalorder %s11, 3
      // Predicated region
      $region17: #{attention_vk_forward.3} parent=5 // pred_check
        %p142 = pneg %p141
      $region18: #{attention_vk_forward.3} parent=5 // pred_check_branch
        %144 = sbr.rel (%p142) target = $region20
      $region19: #{attention_vk_forward.3} parent=5 // pred_region
        // Predicated region
        $region21: #{attention_vk_forward.3} parent=19 // pred_check
          %p145 = pneg %p80
        $region22: #{attention_vk_forward.3} parent=19 // pred_check_branch
          %147 = sbr.rel (%p145) target = $region24
        $region23: #{attention_vk_forward.3} parent=19 // pred_region
          %s148 = sand.u32 %s70, 1
          %s149 = scalar_lea.sflag [#allocation4], %s148
          %s150 = sand.u32 %s70, 1
          %s151 = smul.addr %s150, 128
          %s152 = scalar_lea.vmem [#allocation3], %s151
          %s153 = smul.u32 16, %s20
          %s155 = ssub.s32 2048, 2048
          %156 = vsyncadd %s149, %s155
          %s157 = smul.addr %s153, 3
          %s158 = sadd.s32 %s19, %s157
          %s159 = smul.addr %s158, 128
          %s160 = scalar_lea.hbm %s1, %s159
          %s161 = sshll.u32 %s152, 4
          %s162 = int_to_ptr.vmem [resolvable:$true] %s161
          %167 = dma.hbm_to_vmem [thread:$0]  %s160, 2048, %s162, %s149, 384, 128, 8
        $region24: #{attention_vk_forward.3} parent=19 // pred_fallthru
          _
      $region20: #{attention_vk_forward.3} parent=5 // pred_fallthru
        _
      %p168 = scmp.le.s32.totalorder 1, %s11
      %p169 = scmp.lt.s32.totalorder %s11, 4
      %p170 = pnand %p168, %p169
      %p171 = pneg %p170
      // Predicated region
      $region25: #{attention_vk_forward.3} parent=5 // pred_check
        _
      $region26: #{attention_vk_forward.3} parent=5 // pred_check_branch
        %173 = sbr.rel (%p170) target = $region28
      $region27: #{attention_vk_forward.3} parent=5 // pred_region
        %s174 = ssub.s32 %s11, 1
        %s175 = sand.u32 %s73, 1
        %s176 = scalar_lea.sflag [#allocation4], %s175
        %s177 = sand.u32 %s73, 1
        %s178 = smul.addr %s177, 128
        %s179 = scalar_lea.vmem [#allocation3], %s178
        // Predicated region
        $region29: #{attention_vk_forward.3} parent=27 // pred_check
          %p180 = pneg %p86
        $region30: #{attention_vk_forward.3} parent=27 // pred_check_branch
          %182 = sbr.rel (%p180) target = $region32
        $region31: #{attention_vk_forward.3} parent=27 // pred_region
          %183 = dma.done %s176, 2048
        $region32: #{attention_vk_forward.3} parent=27 // pred_fallthru
          _
        %s184 = smul.u32 4, %s21
        %p185 = scmp.lt.s32.totalorder %s184, 3
        %s186 = scalar_select %p185, %s184, 3
        %p187 = scmp.lt.s32.totalorder %s23, 0
        %s188 = scalar_select %p187, %s23, 0
        %s189 = sadd.s32 %s188, %s186
        %s190 = smul.addr %s189, 8
        %s191 = scalar_lea.vmem %s0, %s190
        %p192 = pneg %p58
        %p193 = pneg %p55
        %s194 = sand.u32 %s73, 1
        %s195 = scalar_lea.sflag [#allocation4], %s194
        %s196 = sand.u32 %s73, 1
        %s197 = smul.addr %s196, 128
        %s198 = scalar_lea.vmem [#allocation3], %s197
        %p199 = pneg %p86
        %p200 = pneg %p83
        %p201 = pneg %p114
        %p202 = pneg %p111
        %s203 = sand.u32 %s101, 1
        %s204 = sand.u32 %s101, 1
        %s205 = smul.addr %s204, 32
        %s206 = scalar_lea.vmem [#allocation5], %s205
        %s207 = smul.u32 4, %s21
        %p208 = scmp.lt.s32.totalorder %s207, 3
        %s209 = scalar_select %p208, %s207, 3
        %p210 = scmp.lt.s32.totalorder %s23, 0
        %s211 = scalar_select %p210, %s23, 0
        %s212 = sadd.s32 %s211, %s209
        %s213 = smul.addr %s212, 8
        %s214 = scalar_lea.vmem %s0, %s213
        %s215 = smul.u32 4, %s21
        %s216 = smul.u32 16, %s23
        %s217 = smul.u32 4, %s21
        %p218 = scmp.eq.s32.totalorder %s23, 0
        // Predicated region
        $region33: #{attention_vk_forward.3} parent=27 // pred_check
          %p219 = pneg %p218
        $region34: #{attention_vk_forward.3} parent=27 // pred_check_branch
          %221 = sbr.rel (%p219) target = $region36
        $region35: #{attention_vk_forward.3} parent=27 // pred_region
          %222 = vst [vmem:[#allocation2] sm:$0xff] 0.0
          %223 = vst [vmem:[#allocation2 + $0x8] sm:$0xff] 0.0
          %224 = vst [vmem:[#allocation2 + $0x10] sm:$0xff] 0.0
          %225 = vst [vmem:[#allocation2 + $0x18] sm:$0xff] 0.0
        $region36: #{attention_vk_forward.3} parent=27 // pred_fallthru
          _
        %v226 = vld [vmem:[#allocation2] sm:$0xff]
        %v227 = vld [vmem:[#allocation2 + $0x8] sm:$0xff]
        %v228 = vld [vmem:[#allocation2 + $0x10] sm:$0xff]
        %v229 = vld [vmem:[#allocation2 + $0x18] sm:$0xff]
        %v230 = vld [vmem:[%s214] sm:$0xff]
        %v231 = vld [vmem:[%s214 + $0x8] sm:$0xff]
        %v232 = vld [vmem:[%s214 + $0x10] sm:$0xff]
        %v233 = vld [vmem:[%s214 + $0x18] sm:$0xff]
        %v234 = vld [vmem:[%s179] sm:$0xff]
        %v235 = vld [vmem:[%s179 + $0x8] sm:$0xff]
        %v236 = vld [vmem:[%s179 + $0x10] sm:$0xff]
        %v237 = vld [vmem:[%s179 + $0x18] sm:$0xff]
        %v238 = vld [vmem:[%s179 + $0x20] sm:$0xff]
        %v239 = vld [vmem:[%s179 + $0x28] sm:$0xff]
        %v240 = vld [vmem:[%s179 + $0x30] sm:$0xff]
        %v241 = vld [vmem:[%s179 + $0x38] sm:$0xff]
        %v242 = vld [vmem:[%s179 + $0x40] sm:$0xff]
        %v243 = vld [vmem:[%s179 + $0x48] sm:$0xff]
        %v244 = vld [vmem:[%s179 + $0x50] sm:$0xff]
        %v245 = vld [vmem:[%s179 + $0x58] sm:$0xff]
        %v246 = vld [vmem:[%s179 + $0x60] sm:$0xff]
        %v247 = vld [vmem:[%s179 + $0x68] sm:$0xff]
        %v248 = vld [vmem:[%s179 + $0x70] sm:$0xff]
        %v249 = vld [vmem:[%s179 + $0x78] sm:$0xff]
        %250 = vmatprep.subr.mxu0 0.0
        %251 = vmatpush1.msra.mxu0 %v234
        %252 = vmatprep.subr.mxu0 0.0
        %253 = vmatpush1.msra.mxu0 %v235
        %254 = vmatprep.subr.mxu0 0.0
        %255 = vmatpush1.msra.mxu0 %v236
        %256 = vmatprep.subr.mxu0 0.0
        %257 = vmatpush1.msra.mxu0 %v237
        %258 = vmatprep.subr.mxu0 0.0
        %259 = vmatpush1.msra.mxu0 %v238
        %260 = vmatprep.subr.mxu0 0.0
        %261 = vmatpush1.msra.mxu0 %v239
        %262 = vmatprep.subr.mxu0 0.0
        %263 = vmatpush1.msra.mxu0 %v240
        %264 = vmatprep.subr.mxu0 0.0
        %265 = vmatpush1.msra.mxu0 %v241
        %266 = vmatprep.subr.mxu0 0.0
        %267 = vmatpush1.msra.mxu0 %v242
        %268 = vmatprep.subr.mxu0 0.0
        %269 = vmatpush1.msra.mxu0 %v243
        %270 = vmatprep.subr.mxu0 0.0
        %271 = vmatpush1.msra.mxu0 %v244
        %272 = vmatprep.subr.mxu0 0.0
        %273 = vmatpush1.msra.mxu0 %v245
        %274 = vmatprep.subr.mxu0 0.0
        %275 = vmatpush1.msra.mxu0 %v246
        %276 = vmatprep.subr.mxu0 0.0
        %277 = vmatpush1.msra.mxu0 %v247
        %278 = vmatprep.subr.mxu0 0.0
        %279 = vmatpush1.msra.mxu0 %v248
        %280 = vmatprep.subr.mxu0 0.0
        %281 = vmatpush1.msra.mxu0 %v249
        %282 = vmatprep.subr.mxu0 0.0
        %283 = vmatpush1.msra.mxu0 0.0
        %284 = vmatprep.subr.mxu0 0.0
        %285 = vmatpush1.msra.mxu0 0.0
        %286 = vmatprep.subr.mxu0 0.0
        %287 = vmatpush1.msra.mxu0 0.0
        %288 = vmatprep.subr.mxu0 0.0
        %289 = vmatpush1.msra.mxu0 0.0
        %290 = vmatprep.subr.mxu0 0.0
        %291 = vmatpush1.msra.mxu0 0.0
        %292 = vmatprep.subr.mxu0 0.0
        %293 = vmatpush1.msra.mxu0 0.0
        %294 = vmatprep.subr.mxu0 0.0
        %295 = vmatpush1.msra.mxu0 0.0
        %296 = vmatprep.subr.mxu0 0.0
        %297 = vmatpush1.msra.mxu0 0.0
        %298 = vmatprep.subr.mxu0 0.0
        %299 = vmatpush1.msra.mxu0 0.0
        %300 = vmatprep.subr.mxu0 0.0
        %301 = vmatpush1.msra.mxu0 0.0
        %302 = vmatprep.subr.mxu0 0.0
        %303 = vmatpush1.msra.mxu0 0.0
        %304 = vmatprep.subr.mxu0 0.0
        %305 = vmatpush1.msra.mxu0 0.0
        %306 = vmatprep.subr.mxu0 0.0
        %307 = vmatpush1.msra.mxu0 0.0
        %308 = vmatprep.subr.mxu0 0.0
        %309 = vmatpush1.msra.mxu0 0.0
        %310 = vmatprep.subr.mxu0 0.0
        %311 = vmatpush1.msra.mxu0 0.0
        %312 = vmatprep.subr.mxu0 0.0
        %313 = vmatpush1.msra.mxu0 0.0
        %314 = vmatprep.mubr.f32.mxu0 0.0
        %315 = vmatmul.mubr.f32.gmra.mrb[0].mxu0 %v230
        %v316 = vpop.f32.mrb[0].mxu0
        %v317 = vadd.f32 0.0, %v316
        %v318 = vpop.f32.mrb[0].mxu0
        %319 = vmatprep.mubr.f32.mxu0 0.0
        %320 = vmatmul.mubr.f32.gmra.mrb[0].mxu0 %v231
        %v321 = vpop.f32.mrb[0].mxu0
        %v322 = vadd.f32 0.0, %v321
        %v323 = vpop.f32.mrb[0].mxu0
        %324 = vmatprep.mubr.f32.mxu0 0.0
        %325 = vmatmul.mubr.f32.gmra.mrb[0].mxu0 %v232
        %v326 = vpop.f32.mrb[0].mxu0
        %v327 = vadd.f32 0.0, %v326
        %v328 = vpop.f32.mrb[0].mxu0
        %329 = vmatprep.mubr.f32.mxu0 0.0
        %330 = vmatmul.mubr.f32.gmra.mrb[0].mxu0 %v233
        %v331 = vpop.f32.mrb[0].mxu0
        %v332 = vadd.f32 0.0, %v331
        %v333 = vpop.f32.mrb[0].mxu0
        %334 = vdwg.mxu0
        %v335 = vadd.f32 %v226, %v317
        %v336 = vadd.f32 %v227, %v322
        %v337 = vadd.f32 %v228, %v327
        %v338 = vadd.f32 %v229, %v332
        %339 = vst [vmem:[#allocation2] sm:$0xff] %v335
        %340 = vst [vmem:[#allocation2 + $0x8] sm:$0xff] %v336
        %341 = vst [vmem:[#allocation2 + $0x10] sm:$0xff] %v337
        %342 = vst [vmem:[#allocation2 + $0x18] sm:$0xff] %v338
        // Predicated region
        $region37: #{attention_vk_forward.3} parent=27 // pred_check
          %p343 = pneg %p218
        $region38: #{attention_vk_forward.3} parent=27 // pred_check_branch
          %345 = sbr.rel (%p343) target = $region40
        $region39: #{attention_vk_forward.3} parent=27 // pred_region
          %v346 = vld [vmem:[#allocation2] sm:$0xff]
          %v347 = vld [vmem:[#allocation2 + $0x8] sm:$0xff]
          %v348 = vld [vmem:[#allocation2 + $0x10] sm:$0xff]
          %v349 = vld [vmem:[#allocation2 + $0x18] sm:$0xff]
          %350 = vst [vmem:[%s206] sm:$0xff] %v346
          %351 = vst [vmem:[%s206 + $0x8] sm:$0xff] %v347
          %352 = vst [vmem:[%s206 + $0x10] sm:$0xff] %v348
          %353 = vst [vmem:[%s206 + $0x18] sm:$0xff] %v349
        $region40: #{attention_vk_forward.3} parent=27 // pred_fallthru
          _
        %s354 = sand.u32 %s101, 1
        %s355 = sand.u32 %s101, 1
        %s356 = smul.addr %s355, 32
        %s357 = scalar_lea.vmem [#allocation5], %s356
        // Predicated region
        $region41: #{attention_vk_forward.3} parent=27 // pred_check
          %p358 = pneg %p111
        $region42: #{attention_vk_forward.3} parent=27 // pred_check_branch
          %360 = sbr.rel (%p358) target = $region44
        $region43: #{attention_vk_forward.3} parent=27 // pred_region
          %s361 = smul.u32 4, %s21
          %s362 = smul.addr %s361, 3
          %s363 = sadd.s32 %s22, %s362
          %s364 = smul.addr %s363, 8
          %s365 = scalar_lea.vmem %s2, %s364
          // Predicated region
          $region45: #{attention_vk_forward.3} parent=43 // pred_check
            _
          $region46: #{attention_vk_forward.3} parent=43 // pred_check_branch
            %367 = sbr.rel (0) target = $region48
          $region47: #{attention_vk_forward.3} parent=43 // pred_region
            // Predicated region
            $region49: #{attention_vk_forward.3} parent=47 // pred_check
              _
            $region50: #{attention_vk_forward.3} parent=47 // pred_check_branch
              %369 = sbr.rel (0) target = $region52
            $region51: #{attention_vk_forward.3} parent=47 // pred_region
              // Predicated region
              $region64: #{attention_vk_forward.3} parent=51 // pred_check
                _
              $region65: #{attention_vk_forward.3} parent=51 // pred_check_branch
                %390 = sbr.rel (0) target = $region67
              $region66: #{attention_vk_forward.3} parent=51 // pred_region
                loop: start=0, step=1, limit=1
                $region68: #{attention_vk_forward.3} parent=66 // loop_pre_header
                  _
                $region69: #{attention_vk_forward.3} parent=66 // loop_header
                  %s392 = sphi 0, %s396
                  %p393 = scmp.ge.s32.totalorder %s392, 1
                  %s397 = sphi %s357, %s357
                  %s398 = sphi %s365, %s365
                $region70: #{attention_vk_forward.3} parent=66 // loop_header_branch
                  %395 = sbr.rel (%p393) target = $region74
                $region71: #{attention_vk_forward.3} parent=66 // loop_body
                  %v399 = vld [vmem:[%s397] sm:$0xff]
                  %400 = vst [vmem:[%s398] sm:$0xff] %v399
                  %v401 = vld [vmem:[%s397 + $0x8] sm:$0xff]
                  %402 = vst [vmem:[%s398 + $0x18] sm:$0xff] %v401
                  %v403 = vld [vmem:[%s397 + $0x10] sm:$0xff]
                  %404 = vst [vmem:[%s398 + $0x30] sm:$0xff] %v403
                  %v405 = vld [vmem:[%s397 + $0x18] sm:$0xff]
                  %406 = vst [vmem:[%s398 + $0x48] sm:$0xff] %v405
                $region72: #{attention_vk_forward.3} parent=66 // loop_footer
                  %s396 = sadd.s32 1, %s392
                $region73: #{attention_vk_forward.3} parent=66 // loop_footer_branch
                  %391 = sbr.rel target = $region69
                $region74: #{attention_vk_forward.3} parent=66 // loop_exit
                  _
              $region67: #{attention_vk_forward.3} parent=51 // pred_fallthru
                _
              // Predicated region
              $region75: #{attention_vk_forward.3} parent=51 // pred_check
                _
              $region76: #{attention_vk_forward.3} parent=51 // pred_check_branch
                %408 = sbr.rel target = $region78
              $region77: #{attention_vk_forward.3} parent=51 // pred_region
                _
              $region78: #{attention_vk_forward.3} parent=51 // pred_fallthru
                _
            $region52: #{attention_vk_forward.3} parent=47 // pred_fallthru
              _
            // Predicated region
            $region53: #{attention_vk_forward.3} parent=47 // pred_check
              _
            $region54: #{attention_vk_forward.3} parent=47 // pred_check_branch
              %371 = sbr.rel target = $region56
            $region55: #{attention_vk_forward.3} parent=47 // pred_region
              loop: start=0, step=1, limit=1
              $region57: #{attention_vk_forward.3} parent=55 // loop_pre_header
                _
              $region58: #{attention_vk_forward.3} parent=55 // loop_header
                %s374 = sphi 0, %s378
                %p375 = scmp.ge.s32.totalorder %s374, 1
                %s379 = sphi %s357, %s357
                %s380 = sphi %s365, %s365
              $region59: #{attention_vk_forward.3} parent=55 // loop_header_branch
                %377 = sbr.rel (%p375) target = $region63
              $region60: #{attention_vk_forward.3} parent=55 // loop_body
                %v381 = vld [vmem:[%s379] sm:$0xff]
                %382 = vst [vmem:[%s380] sm:$0xff] %v381
                %v383 = vld [vmem:[%s379 + $0x8] sm:$0xff]
                %384 = vst [vmem:[%s380 + $0x18] sm:$0xff] %v383
                %v385 = vld [vmem:[%s379 + $0x10] sm:$0xff]
                %386 = vst [vmem:[%s380 + $0x30] sm:$0xff] %v385
                %v387 = vld [vmem:[%s379 + $0x18] sm:$0xff]
                %388 = vst [vmem:[%s380 + $0x48] sm:$0xff] %v387
              $region61: #{attention_vk_forward.3} parent=55 // loop_footer
                %s378 = sadd.s32 1, %s374
              $region62: #{attention_vk_forward.3} parent=55 // loop_footer_branch
                %373 = sbr.rel target = $region58
              $region63: #{attention_vk_forward.3} parent=55 // loop_exit
                _
            $region56: #{attention_vk_forward.3} parent=47 // pred_fallthru
              _
          $region48: #{attention_vk_forward.3} parent=43 // pred_fallthru
            _
          %409 = vnop
        $region44: #{attention_vk_forward.3} parent=27 // pred_fallthru
          _
      $region28: #{attention_vk_forward.3} parent=5 // pred_fallthru
        _
      %p410 = scmp.le.s32.totalorder 2, %s11
      // Predicated region
      $region79: #{attention_vk_forward.3} parent=5 // pred_check
        %p411 = pneg %p410
      $region80: #{attention_vk_forward.3} parent=5 // pred_check_branch
        %413 = sbr.rel (%p411) target = $region82
      $region81: #{attention_vk_forward.3} parent=5 // pred_region
        %s414 = ssub.s32 %s11, 2
        // Predicated region
        $region83: #{attention_vk_forward.3} parent=81 // pred_check
          %p415 = pneg %p117
        $region84: #{attention_vk_forward.3} parent=81 // pred_check_branch
          %417 = sbr.rel (%p415) target = $region86
        $region85: #{attention_vk_forward.3} parent=81 // pred_region
          %s418 = sand.u32 %s102, 1
          %s419 = sand.u32 %s102, 1
          %s420 = smul.addr %s419, 32
          %s421 = scalar_lea.vmem [#allocation5], %s420
        $region86: #{attention_vk_forward.3} parent=81 // pred_fallthru
          _
      $region82: #{attention_vk_forward.3} parent=5 // pred_fallthru
        _
    $region6: #{attention_vk_forward.3} parent=1 // loop_footer
      %s15 = sadd.s32 1, %s11
    $region7: #{attention_vk_forward.3} parent=1 // loop_footer_branch
      %10 = sbr.rel target = $region3
    $region8: #{attention_vk_forward.3} parent=1 // loop_exit
      _
    %422 = vsyncpa [#allocation4], 1
    %s423 = scalar_lea.sflag [#allocation4], 1
    %424 = vsyncpa %s423, 1

// kernel: attention_vk_forward.5
$region0: #{attention_vk_forward.5}
  #allocation0 [shape = 'u32[]', space=smem, size = 0x4, offset = 0x4, fixed_abs, tag = 'smem constant byte address 0x4 - core index']
  #allocation1 [shape = 'u32[144,128]{1,0:T(1,128)}', space=vmem, size = 0x12000, scoped, tag = 'internal scratch']
  #allocation2 [shape = 'f32[32,128]{1,0:T(8,128)}', space=vmem, size = 0x4000, scoped, tag = 'scratch operand']
  %s0 = inlined_call_operand.vmem [shape: f32[32,128], index: 0, kind: input, shape index: {}]
  %s1 = inlined_call_operand.vmem [shape: f32[128,128], index: 1, kind: input, shape index: {}]
  %s2 = inlined_call_operand.vmem [shape: f32[1,128], index: 2, kind: input, shape index: {}]
  %s3 = inlined_call_operand.hbm [shape: f32[32,128], index: 3, kind: output, shape index: {}]
  %s4 = sld [smem:[#allocation0]]
  $region30: #{attention_vk_forward.5} parent=0
    _
  %s6 = ssub.s32 1, %s4
  %s7 = scalar_select 0, %s6, %s4
  $region1: #{attention_vk_forward.5} parent=0
    #allocation3 [shape = 'u8[16384]{0}', space=vmem, size = 0x4000, scoped, tag = 'output window, operand 0, single buffered']
    #allocation4 [shape = 's32[1]{0}', space=sflag, size = 0x4, scoped, tag = 'scoped memory for attention_vk_forward.5']
    %8 = vsyncpa [#allocation4], 0
    // Predicated region
    $region2: #{attention_vk_forward.5} parent=1 // pred_check
      _
    $region3: #{attention_vk_forward.5} parent=1 // pred_check_branch
      %10 = sbr.rel (0) target = $region5
    $region4: #{attention_vk_forward.5} parent=1 // pred_region
      _
    $region5: #{attention_vk_forward.5} parent=1 // pred_fallthru
      _
    // Predicated region
    $region6: #{attention_vk_forward.5} parent=1 // pred_check
      _
    $region7: #{attention_vk_forward.5} parent=1 // pred_check_branch
      %12 = sbr.rel (0) target = $region9
    $region8: #{attention_vk_forward.5} parent=1 // pred_region
      _
    $region9: #{attention_vk_forward.5} parent=1 // pred_fallthru
      _
    // Predicated region
    $region10: #{attention_vk_forward.5} parent=1 // pred_check
      _
    $region11: #{attention_vk_forward.5} parent=1 // pred_check_branch
      %14 = sbr.rel (0) target = $region13
    $region12: #{attention_vk_forward.5} parent=1 // pred_region
      _
    $region13: #{attention_vk_forward.5} parent=1 // pred_fallthru
      _
    %p15 = scmp.eq.s32.totalorder 0, 0
    // Predicated region
    $region14: #{attention_vk_forward.5} parent=1 // pred_check
      %p16 = pneg %p15
    $region15: #{attention_vk_forward.5} parent=1 // pred_check_branch
      %18 = sbr.rel (%p16) target = $region17
    $region16: #{attention_vk_forward.5} parent=1 // pred_region
      %19 = vst [vmem:[#allocation2] sm:$0xff] 0.0
      %20 = vst [vmem:[#allocation2 + $0x8] sm:$0xff] 0.0
      %21 = vst [vmem:[#allocation2 + $0x10] sm:$0xff] 0.0
      %22 = vst [vmem:[#allocation2 + $0x18] sm:$0xff] 0.0
    $region17: #{attention_vk_forward.5} parent=1 // pred_fallthru
      _
    %v23 = vld [vmem:[#allocation2] sm:$0xff]
    %v24 = vld [vmem:[#allocation2 + $0x8] sm:$0xff]
    %v25 = vld [vmem:[#allocation2 + $0x10] sm:$0xff]
    %v26 = vld [vmem:[#allocation2 + $0x18] sm:$0xff]
    %v27 = vld [vmem:[%s0] sm:$0xff]
    %v28 = vld [vmem:[%s0 + $0x8] sm:$0xff]
    %v29 = vld [vmem:[%s0 + $0x10] sm:$0xff]
    %v30 = vld [vmem:[%s0 + $0x18] sm:$0xff]
    %v31 = vld [vmem:[%s1] sm:$0xff]
    %v32 = vld [vmem:[%s1 + $0x8] sm:$0xff]
    %v33 = vld [vmem:[%s1 + $0x10] sm:$0xff]
    %v34 = vld [vmem:[%s1 + $0x18] sm:$0xff]
    %v35 = vld [vmem:[%s1 + $0x20] sm:$0xff]
    %v36 = vld [vmem:[%s1 + $0x28] sm:$0xff]
    %v37 = vld [vmem:[%s1 + $0x30] sm:$0xff]
    %v38 = vld [vmem:[%s1 + $0x38] sm:$0xff]
    %v39 = vld [vmem:[%s1 + $0x40] sm:$0xff]
    %v40 = vld [vmem:[%s1 + $0x48] sm:$0xff]
    %v41 = vld [vmem:[%s1 + $0x50] sm:$0xff]
    %v42 = vld [vmem:[%s1 + $0x58] sm:$0xff]
    %v43 = vld [vmem:[%s1 + $0x60] sm:$0xff]
    %v44 = vld [vmem:[%s1 + $0x68] sm:$0xff]
    %v45 = vld [vmem:[%s1 + $0x70] sm:$0xff]
    %v46 = vld [vmem:[%s1 + $0x78] sm:$0xff]
    %47 = vmatprep.subr.mxu0 0.0
    %48 = vmatpush1.msra.mxu0 %v31
    %49 = vmatprep.subr.mxu0 0.0
    %50 = vmatpush1.msra.mxu0 %v32
    %51 = vmatprep.subr.mxu0 0.0
    %52 = vmatpush1.msra.mxu0 %v33
    %53 = vmatprep.subr.mxu0 0.0
    %54 = vmatpush1.msra.mxu0 %v34
    %55 = vmatprep.subr.mxu0 0.0
    %56 = vmatpush1.msra.mxu0 %v35
    %57 = vmatprep.subr.mxu0 0.0
    %58 = vmatpush1.msra.mxu0 %v36
    %59 = vmatprep.subr.mxu0 0.0
    %60 = vmatpush1.msra.mxu0 %v37
    %61 = vmatprep.subr.mxu0 0.0
    %62 = vmatpush1.msra.mxu0 %v38
    %63 = vmatprep.subr.mxu0 0.0
    %64 = vmatpush1.msra.mxu0 %v39
    %65 = vmatprep.subr.mxu0 0.0
    %66 = vmatpush1.msra.mxu0 %v40
    %67 = vmatprep.subr.mxu0 0.0
    %68 = vmatpush1.msra.mxu0 %v41
    %69 = vmatprep.subr.mxu0 0.0
    %70 = vmatpush1.msra.mxu0 %v42
    %71 = vmatprep.subr.mxu0 0.0
    %72 = vmatpush1.msra.mxu0 %v43
    %73 = vmatprep.subr.mxu0 0.0
    %74 = vmatpush1.msra.mxu0 %v44
    %75 = vmatprep.subr.mxu0 0.0
    %76 = vmatpush1.msra.mxu0 %v45
    %77 = vmatprep.subr.mxu0 0.0
    %78 = vmatpush1.msra.mxu0 %v46
    %79 = vmatprep.subr.mxu0 0.0
    %80 = vmatpush1.msra.mxu0 0.0
    %81 = vmatprep.subr.mxu0 0.0
    %82 = vmatpush1.msra.mxu0 0.0
    %83 = vmatprep.subr.mxu0 0.0
    %84 = vmatpush1.msra.mxu0 0.0
    %85 = vmatprep.subr.mxu0 0.0
    %86 = vmatpush1.msra.mxu0 0.0
    %87 = vmatprep.subr.mxu0 0.0
    %88 = vmatpush1.msra.mxu0 0.0
    %89 = vmatprep.subr.mxu0 0.0
    %90 = vmatpush1.msra.mxu0 0.0
    %91 = vmatprep.subr.mxu0 0.0
    %92 = vmatpush1.msra.mxu0 0.0
    %93 = vmatprep.subr.mxu0 0.0
    %94 = vmatpush1.msra.mxu0 0.0
    %95 = vmatprep.subr.mxu0 0.0
    %96 = vmatpush1.msra.mxu0 0.0
    %97 = vmatprep.subr.mxu0 0.0
    %98 = vmatpush1.msra.mxu0 0.0
    %99 = vmatprep.subr.mxu0 0.0
    %100 = vmatpush1.msra.mxu0 0.0
    %101 = vmatprep.subr.mxu0 0.0
    %102 = vmatpush1.msra.mxu0 0.0
    %103 = vmatprep.subr.mxu0 0.0
    %104 = vmatpush1.msra.mxu0 0.0
    %105 = vmatprep.subr.mxu0 0.0
    %106 = vmatpush1.msra.mxu0 0.0
    %107 = vmatprep.subr.mxu0 0.0
    %108 = vmatpush1.msra.mxu0 0.0
    %109 = vmatprep.subr.mxu0 0.0
    %110 = vmatpush1.msra.mxu0 0.0
    %111 = vmatprep.mubr.f32.mxu0 0.0
    %112 = vmatmul.mubr.f32.gmra.mrb[0].mxu0 %v27
    %v113 = vpop.f32.mrb[0].mxu0
    %v114 = vadd.f32 0.0, %v113
    %v115 = vpop.f32.mrb[0].mxu0
    %116 = vmatprep.mubr.f32.mxu0 0.0
    %117 = vmatmul.mubr.f32.gmra.mrb[0].mxu0 %v28
    %v118 = vpop.f32.mrb[0].mxu0
    %v119 = vadd.f32 0.0, %v118
    %v120 = vpop.f32.mrb[0].mxu0
    %121 = vmatprep.mubr.f32.mxu0 0.0
    %122 = vmatmul.mubr.f32.gmra.mrb[0].mxu0 %v29
    %v123 = vpop.f32.mrb[0].mxu0
    %v124 = vadd.f32 0.0, %v123
    %v125 = vpop.f32.mrb[0].mxu0
    %126 = vmatprep.mubr.f32.mxu0 0.0
    %127 = vmatmul.mubr.f32.gmra.mrb[0].mxu0 %v30
    %v128 = vpop.f32.mrb[0].mxu0
    %v129 = vadd.f32 0.0, %v128
    %v130 = vpop.f32.mrb[0].mxu0
    %131 = vdwg.mxu0
    %v132 = vadd.f32 %v23, %v114
    %v133 = vadd.f32 %v24, %v119
    %v134 = vadd.f32 %v25, %v124
    %v135 = vadd.f32 %v26, %v129
    %136 = vst [vmem:[#allocation2] sm:$0xff] %v132
    %137 = vst [vmem:[#allocation2 + $0x8] sm:$0xff] %v133
    %138 = vst [vmem:[#allocation2 + $0x10] sm:$0xff] %v134
    %139 = vst [vmem:[#allocation2 + $0x18] sm:$0xff] %v135
    // Predicated region
    $region18: #{attention_vk_forward.5} parent=1 // pred_check
      %p140 = pneg %p15
    $region19: #{attention_vk_forward.5} parent=1 // pred_check_branch
      %142 = sbr.rel (%p140) target = $region21
    $region20: #{attention_vk_forward.5} parent=1 // pred_region
      %v143 = vld [vmem:[#allocation2] sm:$0xff]
      %v144 = vld [vmem:[#allocation2 + $0x8] sm:$0xff]
      %v145 = vld [vmem:[#allocation2 + $0x10] sm:$0xff]
      %v146 = vld [vmem:[#allocation2 + $0x18] sm:$0xff]
      %v147 = vld [vmem:[%s2] sm:$0x1]
      %v149 = vlaneseq
      %v150 = vshrl.u32 %v149, 7
      %v151 = vsub.s32 0, %v150
      %v152 = vrot.slane %v147, %v151
      %v154 = vadd.f32 %v143, %v152
      %v155 = vadd.f32 %v144, %v152
      %v156 = vadd.f32 %v145, %v152
      %v157 = vadd.f32 %v146, %v152
      %158 = vst [vmem:[#allocation3] sm:$0xff] %v154
      %159 = vst [vmem:[#allocation3 + $0x8] sm:$0xff] %v155
      %160 = vst [vmem:[#allocation3 + $0x10] sm:$0xff] %v156
      %161 = vst [vmem:[#allocation3 + $0x18] sm:$0xff] %v157
    $region21: #{attention_vk_forward.5} parent=1 // pred_fallthru
      _
    // Predicated region
    $region22: #{attention_vk_forward.5} parent=1 // pred_check
      _
    $region23: #{attention_vk_forward.5} parent=1 // pred_check_branch
      %163 = sbr.rel (0) target = $region25
    $region24: #{attention_vk_forward.5} parent=1 // pred_region
      %s165 = ssub.s32 512, 512
      %166 = vsyncadd [#allocation4], %s165
      %s167 = sshll.u32 [#allocation3], 4
      %s168 = int_to_ptr.vmem [resolvable:$true] %s167
      %173 = dma.vmem_to_hbm [thread:$0]  %s168, 512, %s3, [#allocation4], 128, 128, 8
    $region25: #{attention_vk_forward.5} parent=1 // pred_fallthru
      _
    // Predicated region
    $region26: #{attention_vk_forward.5} parent=1 // pred_check
      _
    $region27: #{attention_vk_forward.5} parent=1 // pred_check_branch
      %175 = sbr.rel (0) target = $region29
    $region28: #{attention_vk_forward.5} parent=1 // pred_region
      %176 = dma.done [#allocation4], 512
    $region29: #{attention_vk_forward.5} parent=1 // pred_fallthru
      _
    %177 = vsyncpa [#allocation4], 1

// kernel: attention_vk_forward.4
$region0: #{attention_vk_forward.4}
  #allocation0 [shape = 'u32[]', space=smem, size = 0x4, offset = 0x4, fixed_abs, tag = 'smem constant byte address 0x4 - core index']
  #allocation1 [shape = 'u32[144,128]{1,0:T(1,128)}', space=vmem, size = 0x12000, scoped, tag = 'internal scratch']
  %s0 = inlined_call_operand.vmem [shape: f32[2,24,384], index: 0, kind: input, shape index: {}, may-alias: {0,1,2}]
  %s1 = inlined_call_operand.vmem [shape: f32[2,24,384], index: 1, kind: input, shape index: {}, may-alias: {0,1,2}]
  %s2 = inlined_call_operand.vmem [shape: f32[2,24,384], index: 2, kind: input, shape index: {}, may-alias: {0,1,2}]
  %s3 = inlined_call_operand.vmem [shape: f32[2,16,128], index: 3, kind: output, shape index: {}]
  %s4 = sld [smem:[#allocation0]]
  $region173: #{attention_vk_forward.4} parent=0
    _
  %s6 = ssub.s32 1, %s4
  %s7 = scalar_select 0, %s6, %s4
  $region1: #{attention_vk_forward.4} parent=0
    #allocation2 [shape = 'u8[16384]{0}', space=vmem, size = 0x4000, scoped, tag = 'input window, operand 0']
    #allocation3 [shape = 'u8[24576]{0}', space=vmem, size = 0x6000, scoped, tag = 'input window, operand 1']
    #allocation4 [shape = 'u8[24576]{0}', space=vmem, size = 0x6000, scoped, tag = 'input window, operand 2']
    loop: start=0, step=1, limit=4
    $region2: #{attention_vk_forward.4} parent=1 // loop_pre_header
      _
    $region3: #{attention_vk_forward.4} parent=1 // loop_header
      %s9 = sphi 0, %s13
      %p10 = scmp.ge.s32.totalorder %s9, 4
      %s16 = sphi 0, %s28
      %s17 = sphi 0, %s24
      %s18 = sphi 0, %s16
      %s19 = sphi 0, %s17
      %s20 = sphi 0, %s18
      %s21 = sphi 0, %s19
      %s33 = sphi 0, %s35
      %s36 = sphi 0, %s33
      %s37 = sphi 0, %s36
      %s53 = sphi 0, %s37
      %s59 = sphi 0, %s61
      %s62 = sphi 0, %s59
      %s63 = sphi 0, %s62
      %s79 = sphi 0, %s63
      %s85 = sphi 0, %s87
      %s88 = sphi 0, %s85
      %s89 = sphi 0, %s88
      %s105 = sphi 0, %s89
      %s113 = sphi 0, %s115
      %s116 = sphi 0, %s113
      %s117 = sphi 0, %s116
      %s133 = sphi 0, %s117
    $region4: #{attention_vk_forward.4} parent=1 // loop_header_branch
      %12 = sbr.rel (%p10) target = $region8
    $region5: #{attention_vk_forward.4} parent=1 // loop_body
      %s14 = ssub.s32 %s9, 1
      %s15 = ssub.s32 %s9, 2
      %s22 = sadd.s32 1, %s17
      %p23 = scmp.ge.s32.totalorder %s22, 1
      %s24 = scalar_select %p23, 0, %s22
      %s25 = sadd.s32 1, %s16
      %s26 = scalar_select %p23, %s25, %s16
      %p27 = scmp.ge.s32.totalorder %s26, 2
      %s28 = scalar_select %p27, 0, %s26
      %s29 = ssub.s32 %s16, %s28
      %s30 = ssub.s32 %s17, %s24
      %s31 = sor.u32 %s29, %s30
      %p32 = scmp.eq.s32.totalorder %s31, 0
      %s34 = sadd.s32 %s33, 1
      %s35 = scalar_select %p32, %s33, %s34
      %p38 = pneg %p32
      %p39 = scmp.eq.s32.totalorder %s9, 1
      %p40 = por %p38, %p39
      %p41 = scmp.ne.s32.totalorder %s33, %s36
      %p42 = scmp.eq.s32.totalorder %s9, 0
      %p43 = por %p41, %p42
      %p44 = scmp.ne.s32.totalorder %s33, %s36
      %p45 = scmp.eq.s32.totalorder %s14, 1
      %p46 = por %p44, %p45
      %p47 = scmp.ne.s32.totalorder %s36, %s37
      %p48 = scmp.eq.s32.totalorder %s14, 0
      %p49 = por %p47, %p48
      %p50 = scmp.ne.s32.totalorder %s36, %s37
      %p51 = scmp.eq.s32.totalorder %s15, 1
      %p52 = por %p50, %p51
      %p54 = scmp.ne.s32.totalorder %s37, %s53
      %p55 = scmp.eq.s32.totalorder %s15, 0
      %p56 = por %p54, %p55
      %s57 = ssub.s32 %s16, %s28
      %p58 = scmp.eq.s32.totalorder %s57, 0
      %s60 = sadd.s32 %s59, 1
      %s61 = scalar_select %p58, %s59, %s60
      %p64 = pneg %p58
      %p65 = scmp.eq.s32.totalorder %s9, 1
      %p66 = por %p64, %p65
      %p67 = scmp.ne.s32.totalorder %s59, %s62
      %p68 = scmp.eq.s32.totalorder %s9, 0
      %p69 = por %p67, %p68
      %p70 = scmp.ne.s32.totalorder %s59, %s62
      %p71 = scmp.eq.s32.totalorder %s14, 1
      %p72 = por %p70, %p71
      %p73 = scmp.ne.s32.totalorder %s62, %s63
      %p74 = scmp.eq.s32.totalorder %s14, 0
      %p75 = por %p73, %p74
      %p76 = scmp.ne.s32.totalorder %s62, %s63
      %p77 = scmp.eq.s32.totalorder %s15, 1
      %p78 = por %p76, %p77
      %p80 = scmp.ne.s32.totalorder %s63, %s79
      %p81 = scmp.eq.s32.totalorder %s15, 0
      %p82 = por %p80, %p81
      %s83 = ssub.s32 %s16, %s28
      %p84 = scmp.eq.s32.totalorder %s83, 0
      %s86 = sadd.s32 %s85, 1
      %s87 = scalar_select %p84, %s85, %s86
      %p90 = pneg %p84
      %p91 = scmp.eq.s32.totalorder %s9, 1
      %p92 = por %p90, %p91
      %p93 = scmp.ne.s32.totalorder %s85, %s88
      %p94 = scmp.eq.s32.totalorder %s9, 0
      %p95 = por %p93, %p94
      %p96 = scmp.ne.s32.totalorder %s85, %s88
      %p97 = scmp.eq.s32.totalorder %s14, 1
      %p98 = por %p96, %p97
      %p99 = scmp.ne.s32.totalorder %s88, %s89
      %p100 = scmp.eq.s32.totalorder %s14, 0
      %p101 = por %p99, %p100
      %p102 = scmp.ne.s32.totalorder %s88, %s89
      %p103 = scmp.eq.s32.totalorder %s15, 1
      %p104 = por %p102, %p103
      %p106 = scmp.ne.s32.totalorder %s89, %s105
      %p107 = scmp.eq.s32.totalorder %s15, 0
      %p108 = por %p106, %p107
      %s109 = ssub.s32 %s16, %s28
      %s110 = ssub.s32 %s17, %s24
      %s111 = sor.u32 %s109, %s110
      %p112 = scmp.eq.s32.totalorder %s111, 0
      %s114 = sadd.s32 %s113, 1
      %s115 = scalar_select %p112, %s113, %s114
      %p118 = pneg %p112
      %p119 = scmp.eq.s32.totalorder %s9, 1
      %p120 = por %p118, %p119
      %p121 = scmp.ne.s32.totalorder %s113, %s116
      %p122 = scmp.eq.s32.totalorder %s9, 0
      %p123 = por %p121, %p122
      %p124 = scmp.ne.s32.totalorder %s113, %s116
      %p125 = scmp.eq.s32.totalorder %s14, 1
      %p126 = por %p124, %p125
      %p127 = scmp.ne.s32.totalorder %s116, %s117
      %p128 = scmp.eq.s32.totalorder %s14, 0
      %p129 = por %p127, %p128
      %p130 = scmp.ne.s32.totalorder %s116, %s117
      %p131 = scmp.eq.s32.totalorder %s15, 1
      %p132 = por %p130, %p131
      %p134 = scmp.ne.s32.totalorder %s117, %s133
      %p135 = scmp.eq.s32.totalorder %s15, 0
      %p136 = por %p134, %p135
      %p137 = scmp.le.s32.totalorder 1, %s9
      %p138 = scmp.lt.s32.totalorder %s9, 3
      %p139 = pnand %p137, %p138
      %p140 = pneg %p139
      // Predicated region
      $region9: #{attention_vk_forward.4} parent=5 // pred_check
        _
      $region10: #{attention_vk_forward.4} parent=5 // pred_check_branch
        %142 = sbr.rel (%p139) target = $region12
      $region11: #{attention_vk_forward.4} parent=5 // pred_region
        %s143 = ssub.s32 %s9, 1
      $region12: #{attention_vk_forward.4} parent=5 // pred_fallthru
        _
      %p144 = scmp.lt.s32.totalorder %s9, 2
      // Predicated region
      $region13: #{attention_vk_forward.4} parent=5 // pred_check
        %p145 = pneg %p144
      $region14: #{attention_vk_forward.4} parent=5 // pred_check_branch
        %147 = sbr.rel (%p145) target = $region16
      $region15: #{attention_vk_forward.4} parent=5 // pred_region
        // Predicated region
        $region17: #{attention_vk_forward.4} parent=15 // pred_check
          %p148 = pneg %p43
        $region18: #{attention_vk_forward.4} parent=15 // pred_check_branch
          %150 = sbr.rel (%p148) target = $region20
        $region19: #{attention_vk_forward.4} parent=15 // pred_region
          %s151 = sand.u32 %s33, 1
          %s152 = sand.u32 %s33, 1
          %s153 = smul.addr %s152, 16
          %s154 = scalar_lea.vmem [#allocation2], %s153
          %s155 = smul.u32 2, %s17
          %s156 = ssub.s32 3, %s155
          %p157 = scmp.lt.s32.totalorder %s156, 2
          %s158 = scalar_select %p157, %s156, 2
          %s159 = smul.u32 128, %s158
          %p160 = scmp.ne.s32.totalorder 0, %s159
          %s161 = smul.addr %s155, 3
          %s162 = smul.addr %s16, 9
          %s163 = sadd.s32 %s161, %s162
          %s164 = smul.addr %s163, 8
          %s165 = scalar_lea.vmem %s0, %s164
          // Predicated region
          $region21: #{attention_vk_forward.4} parent=19 // pred_check
            %p166 = pneg %p160
          $region22: #{attention_vk_forward.4} parent=19 // pred_check_branch
            %168 = sbr.rel (%p166) target = $region24
          $region23: #{attention_vk_forward.4} parent=19 // pred_region
            // Predicated region
            $region25: #{attention_vk_forward.4} parent=23 // pred_check
              _
            $region26: #{attention_vk_forward.4} parent=23 // pred_check_branch
              %170 = sbr.rel (0) target = $region28
            $region27: #{attention_vk_forward.4} parent=23 // pred_region
              // Predicated region
              $region47: #{attention_vk_forward.4} parent=27 // pred_check
                _
              $region48: #{attention_vk_forward.4} parent=27 // pred_check_branch
                %221 = sbr.rel (0) target = $region50
              $region49: #{attention_vk_forward.4} parent=27 // pred_region
                %s222 = sshrl.u32 %s158, 1
                // While loop
                $region51: #{attention_vk_forward.4} parent=49 // loop_pre_header
                  _
                $region52: #{attention_vk_forward.4} parent=49 // loop_header
                  %s224 = sphi 0, %s226
                  %p225 = scmp.ge.s32.totalorder %s224, %s222
                  %s229 = sphi 0, %s238
                  %s230 = sphi %s165, %s241
                  %s231 = sphi %s154, %s242
                $region53: #{attention_vk_forward.4} parent=49 // loop_header_branch
                  %228 = sbr.rel (%p225) target = $region57
                $region54: #{attention_vk_forward.4} parent=49 // loop_body
                  %v232 = vld [vmem:[%s230] sm:$0xff]
                  %233 = vst [vmem:[%s231] sm:$0xff] %v232
                  %v234 = vld [vmem:[%s230 + $0x18] sm:$0xff]
                  %235 = vst [vmem:[%s231 + $0x8] sm:$0xff] %v234
                  %s236 = sadd.s32 1, %s229
                  %p237 = scmp.ge.s32.totalorder %s236, %s222
                  %s238 = scalar_select %p237, 0, %s236
                  %s239 = smul.u32 %s238, 48
                  %s240 = smul.u32 %s238, 16
                  %s241 = scalar_lea.vmem %s165, %s239
                  %s242 = scalar_lea.vmem %s154, %s240 [#allocation2]
                $region55: #{attention_vk_forward.4} parent=49 // loop_footer
                  %s226 = sadd.s32 %s224, 1
                $region56: #{attention_vk_forward.4} parent=49 // loop_footer_branch
                  %223 = sbr.rel target = $region52
                $region57: #{attention_vk_forward.4} parent=49 // loop_exit
                  _
                %s243 = sshrl.u32 %s158, 1
                %s244 = sand.u32 %s158, 1
                %s245 = smul.u32 %s243, 2
                %s246 = smul.u32 24, %s245
                %s247 = scalar_lea.vmem %s165, %s246
                %s248 = smul.u32 8, %s245
                %s249 = scalar_lea.vmem %s154, %s248 [#allocation2]
                // While loop
                $region58: #{attention_vk_forward.4} parent=49 // loop_pre_header
                  _
                $region59: #{attention_vk_forward.4} parent=49 // loop_header
                  %s251 = sphi 0, %s253
                  %p252 = scmp.ge.s32.totalorder %s251, %s244
                  %s256 = sphi 0, %s263
                  %s257 = sphi %s247, %s266
                  %s258 = sphi %s249, %s267
                $region60: #{attention_vk_forward.4} parent=49 // loop_header_branch
                  %255 = sbr.rel (%p252) target = $region64
                $region61: #{attention_vk_forward.4} parent=49 // loop_body
                  %v259 = vld [vmem:[%s257] sm:$0xff]
                  %260 = vst [vmem:[%s258] sm:$0xff] %v259
                  %s261 = sadd.s32 1, %s256
                  %p262 = scmp.ge.s32.totalorder %s261, %s244
                  %s263 = scalar_select %p262, 0, %s261
                  %s264 = smul.u32 %s263, 24
                  %s265 = smul.u32 %s263, 8
                  %s266 = scalar_lea.vmem %s247, %s264
                  %s267 = scalar_lea.vmem %s249, %s265 [#allocation2]
                $region62: #{attention_vk_forward.4} parent=49 // loop_footer
                  %s253 = sadd.s32 %s251, 1
                $region63: #{attention_vk_forward.4} parent=49 // loop_footer_branch
                  %250 = sbr.rel target = $region59
                $region64: #{attention_vk_forward.4} parent=49 // loop_exit
                  _
              $region50: #{attention_vk_forward.4} parent=27 // pred_fallthru
                _
              // Predicated region
              $region65: #{attention_vk_forward.4} parent=27 // pred_check
                _
              $region66: #{attention_vk_forward.4} parent=27 // pred_check_branch
                %269 = sbr.rel target = $region68
              $region67: #{attention_vk_forward.4} parent=27 // pred_region
                _
              $region68: #{attention_vk_forward.4} parent=27 // pred_fallthru
                _
            $region28: #{attention_vk_forward.4} parent=23 // pred_fallthru
              _
            // Predicated region
            $region29: #{attention_vk_forward.4} parent=23 // pred_check
              _
            $region30: #{attention_vk_forward.4} parent=23 // pred_check_branch
              %172 = sbr.rel target = $region32
            $region31: #{attention_vk_forward.4} parent=23 // pred_region
              %s174 = sshrl.u32 %s158, 1
              // While loop
              $region33: #{attention_vk_forward.4} parent=31 // loop_pre_header
                _
              $region34: #{attention_vk_forward.4} parent=31 // loop_header
                %s176 = sphi 0, %s178
                %p177 = scmp.ge.s32.totalorder %s176, %s174
                %s181 = sphi 0, %s190
                %s182 = sphi %s165, %s193
                %s183 = sphi %s154, %s194
              $region35: #{attention_vk_forward.4} parent=31 // loop_header_branch
                %180 = sbr.rel (%p177) target = $region39
              $region36: #{attention_vk_forward.4} parent=31 // loop_body
                %v184 = vld [vmem:[%s182] sm:$0xff]
                %185 = vst [vmem:[%s183] sm:$0xff] %v184
                %v186 = vld [vmem:[%s182 + $0x18] sm:$0xff]
                %187 = vst [vmem:[%s183 + $0x8] sm:$0xff] %v186
                %s188 = sadd.s32 1, %s181
                %p189 = scmp.ge.s32.totalorder %s188, %s174
                %s190 = scalar_select %p189, 0, %s188
                %s191 = smul.u32 %s190, 48
                %s192 = smul.u32 %s190, 16
                %s193 = scalar_lea.vmem %s165, %s191
                %s194 = scalar_lea.vmem %s154, %s192 [#allocation2]
              $region37: #{attention_vk_forward.4} parent=31 // loop_footer
                %s178 = sadd.s32 %s176, 1
              $region38: #{attention_vk_forward.4} parent=31 // loop_footer_branch
                %175 = sbr.rel target = $region34
              $region39: #{attention_vk_forward.4} parent=31 // loop_exit
                _
              %s195 = sshrl.u32 %s158, 1
              %s196 = sand.u32 %s158, 1
              %s197 = smul.u32 %s195, 2
              %s198 = smul.u32 24, %s197
              %s199 = scalar_lea.vmem %s165, %s198
              %s200 = smul.u32 8, %s197
              %s201 = scalar_lea.vmem %s154, %s200 [#allocation2]
              // While loop
              $region40: #{attention_vk_forward.4} parent=31 // loop_pre_header
                _
              $region41: #{attention_vk_forward.4} parent=31 // loop_header
                %s203 = sphi 0, %s205
                %p204 = scmp.ge.s32.totalorder %s203, %s196
                %s208 = sphi 0, %s215
                %s209 = sphi %s199, %s218
                %s210 = sphi %s201, %s219
              $region42: #{attention_vk_forward.4} parent=31 // loop_header_branch
                %207 = sbr.rel (%p204) target = $region46
              $region43: #{attention_vk_forward.4} parent=31 // loop_body
                %v211 = vld [vmem:[%s209] sm:$0xff]
                %212 = vst [vmem:[%s210] sm:$0xff] %v211
                %s213 = sadd.s32 1, %s208
                %p214 = scmp.ge.s32.totalorder %s213, %s196
                %s215 = scalar_select %p214, 0, %s213
                %s216 = smul.u32 %s215, 24
                %s217 = smul.u32 %s215, 8
                %s218 = scalar_lea.vmem %s199, %s216
                %s219 = scalar_lea.vmem %s201, %s217 [#allocation2]
              $region44: #{attention_vk_forward.4} parent=31 // loop_footer
                %s205 = sadd.s32 %s203, 1
              $region45: #{attention_vk_forward.4} parent=31 // loop_footer_branch
                %202 = sbr.rel target = $region41
              $region46: #{attention_vk_forward.4} parent=31 // loop_exit
                _
            $region32: #{attention_vk_forward.4} parent=23 // pred_fallthru
              _
          $region24: #{attention_vk_forward.4} parent=19 // pred_fallthru
            _
          %270 = vnop
        $region20: #{attention_vk_forward.4} parent=15 // pred_fallthru
          _
        // Predicated region
        $region69: #{attention_vk_forward.4} parent=15 // pred_check
          %p271 = pneg %p69
        $region70: #{attention_vk_forward.4} parent=15 // pred_check_branch
          %273 = sbr.rel (%p271) target = $region72
        $region71: #{attention_vk_forward.4} parent=15 // pred_region
          %s274 = sand.u32 %s59, 1
          %s275 = sand.u32 %s59, 1
          %s276 = smul.addr %s275, 24
          %s277 = scalar_lea.vmem [#allocation3], %s276
          %s278 = smul.addr %s16, 9
          %s279 = sadd.s32 1, %s278
          %s280 = smul.addr %s279, 8
          %s281 = scalar_lea.vmem %s1, %s280
          // Predicated region
          $region73: #{attention_vk_forward.4} parent=71 // pred_check
            _
          $region74: #{attention_vk_forward.4} parent=71 // pred_check_branch
            %283 = sbr.rel (0) target = $region76
          $region75: #{attention_vk_forward.4} parent=71 // pred_region
            // Predicated region
            $region77: #{attention_vk_forward.4} parent=75 // pred_check
              _
            $region78: #{attention_vk_forward.4} parent=75 // pred_check_branch
              %285 = sbr.rel (0) target = $region80
            $region79: #{attention_vk_forward.4} parent=75 // pred_region
              // Predicated region
              $region92: #{attention_vk_forward.4} parent=79 // pred_check
                _
              $region93: #{attention_vk_forward.4} parent=79 // pred_check_branch
                %304 = sbr.rel (0) target = $region95
              $region94: #{attention_vk_forward.4} parent=79 // pred_region
                loop: start=0, step=1, limit=1
                $region96: #{attention_vk_forward.4} parent=94 // loop_pre_header
                  _
                $region97: #{attention_vk_forward.4} parent=94 // loop_header
                  %s306 = sphi 0, %s310
                  %p307 = scmp.ge.s32.totalorder %s306, 1
                  %s311 = sphi %s281, %s281
                  %s312 = sphi %s277, %s277
                $region98: #{attention_vk_forward.4} parent=94 // loop_header_branch
                  %309 = sbr.rel (%p307) target = $region102
                $region99: #{attention_vk_forward.4} parent=94 // loop_body
                  %v313 = vld [vmem:[%s311] sm:$0xff]
                  %314 = vst [vmem:[%s312] sm:$0xff] %v313
                  %v315 = vld [vmem:[%s311 + $0x18] sm:$0xff]
                  %316 = vst [vmem:[%s312 + $0x8] sm:$0xff] %v315
                  %v317 = vld [vmem:[%s311 + $0x30] sm:$0xff]
                  %318 = vst [vmem:[%s312 + $0x10] sm:$0xff] %v317
                $region100: #{attention_vk_forward.4} parent=94 // loop_footer
                  %s310 = sadd.s32 1, %s306
                $region101: #{attention_vk_forward.4} parent=94 // loop_footer_branch
                  %305 = sbr.rel target = $region97
                $region102: #{attention_vk_forward.4} parent=94 // loop_exit
                  _
              $region95: #{attention_vk_forward.4} parent=79 // pred_fallthru
                _
              // Predicated region
              $region103: #{attention_vk_forward.4} parent=79 // pred_check
                _
              $region104: #{attention_vk_forward.4} parent=79 // pred_check_branch
                %320 = sbr.rel target = $region106
              $region105: #{attention_vk_forward.4} parent=79 // pred_region
                _
              $region106: #{attention_vk_forward.4} parent=79 // pred_fallthru
                _
            $region80: #{attention_vk_forward.4} parent=75 // pred_fallthru
              _
            // Predicated region
            $region81: #{attention_vk_forward.4} parent=75 // pred_check
              _
            $region82: #{attention_vk_forward.4} parent=75 // pred_check_branch
              %287 = sbr.rel target = $region84
            $region83: #{attention_vk_forward.4} parent=75 // pred_region
              loop: start=0, step=1, limit=1
              $region85: #{attention_vk_forward.4} parent=83 // loop_pre_header
                _
              $region86: #{attention_vk_forward.4} parent=83 // loop_header
                %s290 = sphi 0, %s294
                %p291 = scmp.ge.s32.totalorder %s290, 1
                %s295 = sphi %s281, %s281
                %s296 = sphi %s277, %s277
              $region87: #{attention_vk_forward.4} parent=83 // loop_header_branch
                %293 = sbr.rel (%p291) target = $region91
              $region88: #{attention_vk_forward.4} parent=83 // loop_body
                %v297 = vld [vmem:[%s295] sm:$0xff]
                %298 = vst [vmem:[%s296] sm:$0xff] %v297
                %v299 = vld [vmem:[%s295 + $0x18] sm:$0xff]
                %300 = vst [vmem:[%s296 + $0x8] sm:$0xff] %v299
                %v301 = vld [vmem:[%s295 + $0x30] sm:$0xff]
                %302 = vst [vmem:[%s296 + $0x10] sm:$0xff] %v301
              $region89: #{attention_vk_forward.4} parent=83 // loop_footer
                %s294 = sadd.s32 1, %s290
              $region90: #{attention_vk_forward.4} parent=83 // loop_footer_branch
                %289 = sbr.rel target = $region86
              $region91: #{attention_vk_forward.4} parent=83 // loop_exit
                _
            $region84: #{attention_vk_forward.4} parent=75 // pred_fallthru
              _
          $region76: #{attention_vk_forward.4} parent=71 // pred_fallthru
            _
          %321 = vnop
        $region72: #{attention_vk_forward.4} parent=15 // pred_fallthru
          _
        // Predicated region
        $region107: #{attention_vk_forward.4} parent=15 // pred_check
          %p322 = pneg %p95
        $region108: #{attention_vk_forward.4} parent=15 // pred_check_branch
          %324 = sbr.rel (%p322) target = $region110
        $region109: #{attention_vk_forward.4} parent=15 // pred_region
          %s325 = sand.u32 %s85, 1
          %s326 = sand.u32 %s85, 1
          %s327 = smul.addr %s326, 24
          %s328 = scalar_lea.vmem [#allocation4], %s327
          %s329 = smul.addr %s16, 9
          %s330 = sadd.s32 2, %s329
          %s331 = smul.addr %s330, 8
          %s332 = scalar_lea.vmem %s2, %s331
          // Predicated region
          $region111: #{attention_vk_forward.4} parent=109 // pred_check
            _
          $region112: #{attention_vk_forward.4} parent=109 // pred_check_branch
            %334 = sbr.rel (0) target = $region114
          $region113: #{attention_vk_forward.4} parent=109 // pred_region
            // Predicated region
            $region115: #{attention_vk_forward.4} parent=113 // pred_check
              _
            $region116: #{attention_vk_forward.4} parent=113 // pred_check_branch
              %336 = sbr.rel (0) target = $region118
            $region117: #{attention_vk_forward.4} parent=113 // pred_region
              // Predicated region
              $region130: #{attention_vk_forward.4} parent=117 // pred_check
                _
              $region131: #{attention_vk_forward.4} parent=117 // pred_check_branch
                %355 = sbr.rel (0) target = $region133
              $region132: #{attention_vk_forward.4} parent=117 // pred_region
                loop: start=0, step=1, limit=1
                $region134: #{attention_vk_forward.4} parent=132 // loop_pre_header
                  _
                $region135: #{attention_vk_forward.4} parent=132 // loop_header
                  %s357 = sphi 0, %s361
                  %p358 = scmp.ge.s32.totalorder %s357, 1
                  %s362 = sphi %s332, %s332
                  %s363 = sphi %s328, %s328
                $region136: #{attention_vk_forward.4} parent=132 // loop_header_branch
                  %360 = sbr.rel (%p358) target = $region140
                $region137: #{attention_vk_forward.4} parent=132 // loop_body
                  %v364 = vld [vmem:[%s362] sm:$0xff]
                  %365 = vst [vmem:[%s363] sm:$0xff] %v364
                  %v366 = vld [vmem:[%s362 + $0x18] sm:$0xff]
                  %367 = vst [vmem:[%s363 + $0x8] sm:$0xff] %v366
                  %v368 = vld [vmem:[%s362 + $0x30] sm:$0xff]
                  %369 = vst [vmem:[%s363 + $0x10] sm:$0xff] %v368
                $region138: #{attention_vk_forward.4} parent=132 // loop_footer
                  %s361 = sadd.s32 1, %s357
                $region139: #{attention_vk_forward.4} parent=132 // loop_footer_branch
                  %356 = sbr.rel target = $region135
                $region140: #{attention_vk_forward.4} parent=132 // loop_exit
                  _
              $region133: #{attention_vk_forward.4} parent=117 // pred_fallthru
                _
              // Predicated region
              $region141: #{attention_vk_forward.4} parent=117 // pred_check
                _
              $region142: #{attention_vk_forward.4} parent=117 // pred_check_branch
                %371 = sbr.rel target = $region144
              $region143: #{attention_vk_forward.4} parent=117 // pred_region
                _
              $region144: #{attention_vk_forward.4} parent=117 // pred_fallthru
                _
            $region118: #{attention_vk_forward.4} parent=113 // pred_fallthru
              _
            // Predicated region
            $region119: #{attention_vk_forward.4} parent=113 // pred_check
              _
            $region120: #{attention_vk_forward.4} parent=113 // pred_check_branch
              %338 = sbr.rel target = $region122
            $region121: #{attention_vk_forward.4} parent=113 // pred_region
              loop: start=0, step=1, limit=1
              $region123: #{attention_vk_forward.4} parent=121 // loop_pre_header
                _
              $region124: #{attention_vk_forward.4} parent=121 // loop_header
                %s341 = sphi 0, %s345
                %p342 = scmp.ge.s32.totalorder %s341, 1
                %s346 = sphi %s332, %s332
                %s347 = sphi %s328, %s328
              $region125: #{attention_vk_forward.4} parent=121 // loop_header_branch
                %344 = sbr.rel (%p342) target = $region129
              $region126: #{attention_vk_forward.4} parent=121 // loop_body
                %v348 = vld [vmem:[%s346] sm:$0xff]
                %349 = vst [vmem:[%s347] sm:$0xff] %v348
                %v350 = vld [vmem:[%s346 + $0x18] sm:$0xff]
                %351 = vst [vmem:[%s347 + $0x8] sm:$0xff] %v350
                %v352 = vld [vmem:[%s346 + $0x30] sm:$0xff]
                %353 = vst [vmem:[%s347 + $0x10] sm:$0xff] %v352
              $region127: #{attention_vk_forward.4} parent=121 // loop_footer
                %s345 = sadd.s32 1, %s341
              $region128: #{attention_vk_forward.4} parent=121 // loop_footer_branch
                %340 = sbr.rel target = $region124
              $region129: #{attention_vk_forward.4} parent=121 // loop_exit
                _
            $region122: #{attention_vk_forward.4} parent=113 // pred_fallthru
              _
          $region114: #{attention_vk_forward.4} parent=109 // pred_fallthru
            _
          %372 = vnop
        $region110: #{attention_vk_forward.4} parent=15 // pred_fallthru
          _
      $region16: #{attention_vk_forward.4} parent=5 // pred_fallthru
        _
      %p373 = scmp.le.s32.totalorder 1, %s9
      %p374 = scmp.lt.s32.totalorder %s9, 3
      %p375 = pnand %p373, %p374
      %p376 = pneg %p375
      // Predicated region
      $region145: #{attention_vk_forward.4} parent=5 // pred_check
        _
      $region146: #{attention_vk_forward.4} parent=5 // pred_check_branch
        %378 = sbr.rel (%p375) target = $region148
      $region147: #{attention_vk_forward.4} parent=5 // pred_region
        %s379 = ssub.s32 %s9, 1
        %s380 = sand.u32 %s36, 1
        %s381 = sand.u32 %s36, 1
        %s382 = smul.addr %s381, 16
        %s383 = scalar_lea.vmem [#allocation2], %s382
        // Predicated region
        $region149: #{attention_vk_forward.4} parent=147 // pred_check
          %p384 = pneg %p49
        $region150: #{attention_vk_forward.4} parent=147 // pred_check_branch
          %386 = sbr.rel (%p384) target = $region152
        $region151: #{attention_vk_forward.4} parent=147 // pred_region
          _
        $region152: #{attention_vk_forward.4} parent=147 // pred_fallthru
          _
        %s387 = sand.u32 %s62, 1
        %s388 = sand.u32 %s62, 1
        %s389 = smul.addr %s388, 24
        %s390 = scalar_lea.vmem [#allocation3], %s389
        // Predicated region
        $region153: #{attention_vk_forward.4} parent=147 // pred_check
          %p391 = pneg %p75
        $region154: #{attention_vk_forward.4} parent=147 // pred_check_branch
          %393 = sbr.rel (%p391) target = $region156
        $region155: #{attention_vk_forward.4} parent=147 // pred_region
          _
        $region156: #{attention_vk_forward.4} parent=147 // pred_fallthru
          _
        %s394 = sand.u32 %s88, 1
        %s395 = sand.u32 %s88, 1
        %s396 = smul.addr %s395, 24
        %s397 = scalar_lea.vmem [#allocation4], %s396
        // Predicated region
        $region157: #{attention_vk_forward.4} parent=147 // pred_check
          %p398 = pneg %p101
        $region158: #{attention_vk_forward.4} parent=147 // pred_check_branch
          %400 = sbr.rel (%p398) target = $region160
        $region159: #{attention_vk_forward.4} parent=147 // pred_region
          _
        $region160: #{attention_vk_forward.4} parent=147 // pred_fallthru
          _
        %s401 = sand.u32 %s36, 1
        %s402 = sand.u32 %s36, 1
        %s403 = smul.addr %s402, 16
        %s404 = scalar_lea.vmem [#allocation2], %s403
        %p405 = pneg %p49
        %p406 = pneg %p46
        %s407 = sand.u32 %s62, 1
        %s408 = sand.u32 %s62, 1
        %s409 = smul.addr %s408, 24
        %s410 = scalar_lea.vmem [#allocation3], %s409
        %p411 = pneg %p75
        %p412 = pneg %p72
        %s413 = sand.u32 %s88, 1
        %s414 = sand.u32 %s88, 1
        %s415 = smul.addr %s414, 24
        %s416 = scalar_lea.vmem [#allocation4], %s415
        %p417 = pneg %p101
        %p418 = pneg %p98
        %p419 = pneg %p129
        %p420 = pneg %p126
        %s421 = smul.u32 2, %s19
        %p422 = scmp.lt.s32.totalorder %s18, 1
        %s423 = scalar_select %p422, %s18, 1
        %p424 = scmp.lt.s32.totalorder %s421, 1
        %s425 = scalar_select %p424, %s421, 1
        %s426 = smul.addr %s423, 2
        %s427 = sadd.s32 %s425, %s426
        %s428 = smul.addr %s427, 8
        %s429 = scalar_lea.vmem %s3, %s428
        %s430 = smul.u32 2, %s19
        %s431 = ssub.s32 3, %s430
        %p432 = scmp.lt.s32.totalorder %s431, 2
        %s433 = scalar_select %p432, %s431, 2
        %s434 = smul.u32 128, %s433
        %s435 = smul.u32 2, %s19
        %p436 = scmp.lt.s32.totalorder %s18, 1
        %s437 = scalar_select %p436, %s18, 1
        %p438 = scmp.lt.s32.totalorder %s435, 1
        %s439 = scalar_select %p438, %s435, 1
        %s440 = smul.addr %s437, 2
        %s441 = sadd.s32 %s439, %s440
        %s442 = smul.addr %s441, 8
        %s443 = scalar_lea.vmem %s3, %s442
        %s444 = smul.u32 2, %s19
        %v445 = vld [vmem:[%s383] sm:$0xff]
        %v446 = vld [vmem:[%s383 + $0x8] sm:$0xff]
        %v447 = vmul.f32 %v445, 0.17677669
        %v448 = vmul.f32 %v446, 0.17677669
        %v449 = vld [vmem:[%s390] sm:$0xff]
        %v450 = vld [vmem:[%s390 + $0x8] sm:$0xff]
        %v451 = vld [vmem:[%s390 + $0x10] sm:$0xff]
        %v452 = vld [vmem:[%s397] sm:$0xff]
        %v453 = vld [vmem:[%s397 + $0x8] sm:$0xff]
        %v454 = vld [vmem:[%s397 + $0x10] sm:$0xff]
        %vm455 = vcmask 261120
        %v457 = vsel %vm455, %v447, 0
        %v460 = vsel %vm455, %v448, 0
        %v463 = vsel %vm455, %v449, 0
        %v466 = vsel %vm455, %v450, 0
        %v469 = vsel %vm455, %v451, 0
        %471 = vmatprep.subr.mxu0 0.0
        %472 = vmatpush1.xpose.msra.mxu0 %v463
        %473 = vmatprep.subr.mxu0 0.0
        %474 = vmatpush1.xpose.msra.mxu0 %v466
        %475 = vmatprep.subr.mxu0 0.0
        %476 = vmatpush1.xpose.msra.mxu0 %v469
        %477 = vmatprep.subr.mxu0 0.0
        %478 = vmatpush1.xpose.msra.mxu0 0.0
        %479 = vmatprep.subr.mxu0 0.0
        %480 = vmatpush1.xpose.msra.mxu0 0.0
        %481 = vmatprep.subr.mxu0 0.0
        %482 = vmatpush1.xpose.msra.mxu0 0.0
        %483 = vmatprep.subr.mxu0 0.0
        %484 = vmatpush1.xpose.msra.mxu0 0.0
        %485 = vmatprep.subr.mxu0 0.0
        %486 = vmatpush1.xpose.msra.mxu0 0.0
        %487 = vmatprep.subr.mxu0 0.0
        %488 = vmatpush1.xpose.msra.mxu0 0.0
        %489 = vmatprep.subr.mxu0 0.0
        %490 = vmatpush1.xpose.msra.mxu0 0.0
        %491 = vmatprep.subr.mxu0 0.0
        %492 = vmatpush1.xpose.msra.mxu0 0.0
        %493 = vmatprep.subr.mxu0 0.0
        %494 = vmatpush1.xpose.msra.mxu0 0.0
        %495 = vmatprep.subr.mxu0 0.0
        %496 = vmatpush1.xpose.msra.mxu0 0.0
        %497 = vmatprep.subr.mxu0 0.0
        %498 = vmatpush1.xpose.msra.mxu0 0.0
        %499 = vmatprep.subr.mxu0 0.0
        %500 = vmatpush1.xpose.msra.mxu0 0.0
        %501 = vmatprep.subr.mxu0 0.0
        %502 = vmatpush1.xpose.msra.mxu0 0.0
        %503 = vmatprep.subr.mxu0 0.0
        %504 = vmatpush1.xpose.msra.mxu0 0.0
        %505 = vmatprep.subr.mxu0 0.0
        %506 = vmatpush1.xpose.msra.mxu0 0.0
        %507 = vmatprep.subr.mxu0 0.0
        %508 = vmatpush1.xpose.msra.mxu0 0.0
        %509 = vmatprep.subr.mxu0 0.0
        %510 = vmatpush1.xpose.msra.mxu0 0.0
        %511 = vmatprep.subr.mxu0 0.0
        %512 = vmatpush1.xpose.msra.mxu0 0.0
        %513 = vmatprep.subr.mxu0 0.0
        %514 = vmatpush1.xpose.msra.mxu0 0.0
        %515 = vmatprep.subr.mxu0 0.0
        %516 = vmatpush1.xpose.msra.mxu0 0.0
        %517 = vmatprep.subr.mxu0 0.0
        %518 = vmatpush1.xpose.msra.mxu0 0.0
        %519 = vmatprep.subr.mxu0 0.0
        %520 = vmatpush1.xpose.msra.mxu0 0.0
        %521 = vmatprep.subr.mxu0 0.0
        %522 = vmatpush1.xpose.msra.mxu0 0.0
        %523 = vmatprep.subr.mxu0 0.0
        %524 = vmatpush1.xpose.msra.mxu0 0.0
        %525 = vmatprep.subr.mxu0 0.0
        %526 = vmatpush1.xpose.msra.mxu0 0.0
        %527 = vmatprep.subr.mxu0 0.0
        %528 = vmatpush1.xpose.msra.mxu0 0.0
        %529 = vmatprep.subr.mxu0 0.0
        %530 = vmatpush1.xpose.msra.mxu0 0.0
        %531 = vmatprep.subr.mxu0 0.0
        %532 = vmatpush1.xpose.msra.mxu0 0.0
        %533 = vmatprep.subr.mxu0 0.0
        %534 = vmatpush1.xpose.msra.mxu0 0.0
        %535 = vmatprep.mubr.f32.mxu0 0.0
        %536 = vmatmul.mubr.f32.gmra.mrb[0].mxu0 %v457
        %v537 = vpop.f32.mrb[0].mxu0
        %v538 = vadd.f32 0.0, %v537
        %v539 = vpop.f32.mrb[0].mxu0
        %540 = vmatprep.mubr.f32.mxu0 0.0
        %541 = vmatmul.mubr.f32.gmra.mrb[0].mxu0 %v460
        %v542 = vpop.f32.mrb[0].mxu0
        %v543 = vadd.f32 0.0, %v542
        %v544 = vpop.f32.mrb[0].mxu0
        %545 = vdwg.mxu0
        %vm546 = vcmask 195584
        %v547 = vsel %vm546, %v538, -inf
        %548 = vmax.xlane.f32.xlu0 %v547
        %v549 = vpop.xlane.xlu0 %548
        %v550 = vsel %vm546, %v543, -inf
        %551 = vmax.xlane.f32.xlu0 %v550
        %v552 = vpop.xlane.xlu0 %551
        %v553 = vsub.f32 %v538, %v549
        %v554 = vsub.f32 %v543, %v552
        %v555 = vmul.f32 %v553, 1.442695
        %v556 = vpow.pop %v555
        %v557 = vmul.f32 %v554, 1.442695
        %v558 = vpow.pop %v557
        %v559 = vsel %vm546, %v556, 0.0
        %560 = vadd.xlane.f32.xlu0 %v559
        %v561 = vpop.xlane.xlu0 %560
        %v562 = vsel %vm546, %v558, 0.0
        %563 = vadd.xlane.f32.xlu0 %v562
        %v564 = vpop.xlane.xlu0 %563
        %v566 = vsel %vm546, %v556, 0
        %v569 = vsel %vm546, %v558, 0
        %571 = vmatprep.subr.mxu0 0.0
        %572 = vmatpush1.msra.mxu0 %v452
        %573 = vmatprep.subr.mxu0 0.0
        %574 = vmatpush1.msra.mxu0 %v453
        %575 = vmatprep.subr.mxu0 0.0
        %576 = vmatpush1.msra.mxu0 %v454
        %577 = vmatprep.subr.mxu0 0.0
        %578 = vmatpush1.msra.mxu0 0.0
        %579 = vmatprep.subr.mxu0 0.0
        %580 = vmatpush1.msra.mxu0 0.0
        %581 = vmatprep.subr.mxu0 0.0
        %582 = vmatpush1.msra.mxu0 0.0
        %583 = vmatprep.subr.mxu0 0.0
        %584 = vmatpush1.msra.mxu0 0.0
        %585 = vmatprep.subr.mxu0 0.0
        %586 = vmatpush1.msra.mxu0 0.0
        %587 = vmatprep.subr.mxu0 0.0
        %588 = vmatpush1.msra.mxu0 0.0
        %589 = vmatprep.subr.mxu0 0.0
        %590 = vmatpush1.msra.mxu0 0.0
        %591 = vmatprep.subr.mxu0 0.0
        %592 = vmatpush1.msra.mxu0 0.0
        %593 = vmatprep.subr.mxu0 0.0
        %594 = vmatpush1.msra.mxu0 0.0
        %595 = vmatprep.subr.mxu0 0.0
        %596 = vmatpush1.msra.mxu0 0.0
        %597 = vmatprep.subr.mxu0 0.0
        %598 = vmatpush1.msra.mxu0 0.0
        %599 = vmatprep.subr.mxu0 0.0
        %600 = vmatpush1.msra.mxu0 0.0
        %601 = vmatprep.subr.mxu0 0.0
        %602 = vmatpush1.msra.mxu0 0.0
        %603 = vmatprep.subr.mxu0 0.0
        %604 = vmatpush1.msra.mxu0 0.0
        %605 = vmatprep.subr.mxu0 0.0
        %606 = vmatpush1.msra.mxu0 0.0
        %607 = vmatprep.subr.mxu0 0.0
        %608 = vmatpush1.msra.mxu0 0.0
        %609 = vmatprep.subr.mxu0 0.0
        %610 = vmatpush1.msra.mxu0 0.0
        %611 = vmatprep.subr.mxu0 0.0
        %612 = vmatpush1.msra.mxu0 0.0
        %613 = vmatprep.subr.mxu0 0.0
        %614 = vmatpush1.msra.mxu0 0.0
        %615 = vmatprep.subr.mxu0 0.0
        %616 = vmatpush1.msra.mxu0 0.0
        %617 = vmatprep.subr.mxu0 0.0
        %618 = vmatpush1.msra.mxu0 0.0
        %619 = vmatprep.subr.mxu0 0.0
        %620 = vmatpush1.msra.mxu0 0.0
        %621 = vmatprep.subr.mxu0 0.0
        %622 = vmatpush1.msra.mxu0 0.0
        %623 = vmatprep.subr.mxu0 0.0
        %624 = vmatpush1.msra.mxu0 0.0
        %625 = vmatprep.subr.mxu0 0.0
        %626 = vmatpush1.msra.mxu0 0.0
        %627 = vmatprep.subr.mxu0 0.0
        %628 = vmatpush1.msra.mxu0 0.0
        %629 = vmatprep.subr.mxu0 0.0
        %630 = vmatpush1.msra.mxu0 0.0
        %631 = vmatprep.subr.mxu0 0.0
        %632 = vmatpush1.msra.mxu0 0.0
        %633 = vmatprep.subr.mxu0 0.0
        %634 = vmatpush1.msra.mxu0 0.0
        %635 = vmatprep.mubr.f32.mxu0 0.0
        %636 = vmatmul.mubr.f32.gmra.mrb[0].mxu0 %v566
        %v637 = vpop.f32.mrb[0].mxu0
        %v638 = vadd.f32 0.0, %v637
        %v639 = vpop.f32.mrb[0].mxu0
        %640 = vmatprep.mubr.f32.mxu0 0.0
        %641 = vmatmul.mubr.f32.gmra.mrb[0].mxu0 %v569
        %v642 = vpop.f32.mrb[0].mxu0
        %v643 = vadd.f32 0.0, %v642
        %v644 = vpop.f32.mrb[0].mxu0
        %645 = vdwg.mxu0
        %v646 = vrcp.pop %v561
        %v647 = vrcp.pop %v564
        %v648 = vmul.f32 %v638, %v646
        %v649 = vmul.f32 %v643, %v647
        %650 = vrot.lane.b32.xlu0 %v447, 96
        %v651 = vpop.permute.xlu0 %650
        %652 = vrot.lane.b32.xlu0 %v448, 96
        %v653 = vpop.permute.xlu0 %652
        %654 = vrot.lane.b32.xlu0 %v449, 96
        %v655 = vpop.permute.xlu0 %654
        %656 = vrot.lane.b32.xlu0 %v450, 96
        %v657 = vpop.permute.xlu0 %656
        %658 = vrot.lane.b32.xlu0 %v451, 96
        %v659 = vpop.permute.xlu0 %658
        %v660 = vsel %vm455, %v651, 0
        %v662 = vsel %vm455, %v653, 0
        %v664 = vsel %vm455, %v655, 0
        %v666 = vsel %vm455, %v657, 0
        %v668 = vsel %vm455, %v659, 0
        %670 = vmatprep.subr.mxu0 0.0
        %671 = vmatpush1.xpose.msra.mxu0 %v664
        %672 = vmatprep.subr.mxu0 0.0
        %673 = vmatpush1.xpose.msra.mxu0 %v666
        %674 = vmatprep.subr.mxu0 0.0
        %675 = vmatpush1.xpose.msra.mxu0 %v668
        %676 = vmatprep.subr.mxu0 0.0
        %677 = vmatpush1.xpose.msra.mxu0 0.0
        %678 = vmatprep.subr.mxu0 0.0
        %679 = vmatpush1.xpose.msra.mxu0 0.0
        %680 = vmatprep.subr.mxu0 0.0
        %681 = vmatpush1.xpose.msra.mxu0 0.0
        %682 = vmatprep.subr.mxu0 0.0
        %683 = vmatpush1.xpose.msra.mxu0 0.0
        %684 = vmatprep.subr.mxu0 0.0
        %685 = vmatpush1.xpose.msra.mxu0 0.0
        %686 = vmatprep.subr.mxu0 0.0
        %687 = vmatpush1.xpose.msra.mxu0 0.0
        %688 = vmatprep.subr.mxu0 0.0
        %689 = vmatpush1.xpose.msra.mxu0 0.0
        %690 = vmatprep.subr.mxu0 0.0
        %691 = vmatpush1.xpose.msra.mxu0 0.0
        %692 = vmatprep.subr.mxu0 0.0
        %693 = vmatpush1.xpose.msra.mxu0 0.0
        %694 = vmatprep.subr.mxu0 0.0
        %695 = vmatpush1.xpose.msra.mxu0 0.0
        %696 = vmatprep.subr.mxu0 0.0
        %697 = vmatpush1.xpose.msra.mxu0 0.0
        %698 = vmatprep.subr.mxu0 0.0
        %699 = vmatpush1.xpose.msra.mxu0 0.0
        %700 = vmatprep.subr.mxu0 0.0
        %701 = vmatpush1.xpose.msra.mxu0 0.0
        %702 = vmatprep.subr.mxu0 0.0
        %703 = vmatpush1.xpose.msra.mxu0 0.0
        %704 = vmatprep.subr.mxu0 0.0
        %705 = vmatpush1.xpose.msra.mxu0 0.0
        %706 = vmatprep.subr.mxu0 0.0
        %707 = vmatpush1.xpose.msra.mxu0 0.0
        %708 = vmatprep.subr.mxu0 0.0
        %709 = vmatpush1.xpose.msra.mxu0 0.0
        %710 = vmatprep.subr.mxu0 0.0
        %711 = vmatpush1.xpose.msra.mxu0 0.0
        %712 = vmatprep.subr.mxu0 0.0
        %713 = vmatpush1.xpose.msra.mxu0 0.0
        %714 = vmatprep.subr.mxu0 0.0
        %715 = vmatpush1.xpose.msra.mxu0 0.0
        %716 = vmatprep.subr.mxu0 0.0
        %717 = vmatpush1.xpose.msra.mxu0 0.0
        %718 = vmatprep.subr.mxu0 0.0
        %719 = vmatpush1.xpose.msra.mxu0 0.0
        %720 = vmatprep.subr.mxu0 0.0
        %721 = vmatpush1.xpose.msra.mxu0 0.0
        %722 = vmatprep.subr.mxu0 0.0
        %723 = vmatpush1.xpose.msra.mxu0 0.0
        %724 = vmatprep.subr.mxu0 0.0
        %725 = vmatpush1.xpose.msra.mxu0 0.0
        %726 = vmatprep.subr.mxu0 0.0
        %727 = vmatpush1.xpose.msra.mxu0 0.0
        %728 = vmatprep.subr.mxu0 0.0
        %729 = vmatpush1.xpose.msra.mxu0 0.0
        %730 = vmatprep.subr.mxu0 0.0
        %731 = vmatpush1.xpose.msra.mxu0 0.0
        %732 = vmatprep.subr.mxu0 0.0
        %733 = vmatpush1.xpose.msra.mxu0 0.0
        %734 = vmatprep.mubr.f32.mxu0 0.0
        %735 = vmatmul.mubr.f32.gmra.mrb[0].mxu0 %v660
        %v736 = vpop.f32.mrb[0].mxu0
        %v737 = vadd.f32 0.0, %v736
        %v738 = vpop.f32.mrb[0].mxu0
        %739 = vmatprep.mubr.f32.mxu0 0.0
        %740 = vmatmul.mubr.f32.gmra.mrb[0].mxu0 %v662
        %v741 = vpop.f32.mrb[0].mxu0
        %v742 = vadd.f32 0.0, %v741
        %v743 = vpop.f32.mrb[0].mxu0
        %744 = vdwg.mxu0
        %v745 = vsel %vm546, %v737, -inf
        %746 = vmax.xlane.f32.xlu0 %v745
        %v747 = vpop.xlane.xlu0 %746
        %v748 = vsel %vm546, %v742, -inf
        %749 = vmax.xlane.f32.xlu0 %v748
        %v750 = vpop.xlane.xlu0 %749
        %v751 = vsub.f32 %v737, %v747
        %v752 = vsub.f32 %v742, %v750
        %v753 = vmul.f32 %v751, 1.442695
        %v754 = vpow.pop %v753
        %v755 = vmul.f32 %v752, 1.442695
        %v756 = vpow.pop %v755
        %v757 = vsel %vm546, %v754, 0.0
        %758 = vadd.xlane.f32.xlu0 %v757
        %v759 = vpop.xlane.xlu0 %758
        %v760 = vsel %vm546, %v756, 0.0
        %761 = vadd.xlane.f32.xlu0 %v760
        %v762 = vpop.xlane.xlu0 %761
        %766 = vrot.lane.b32.xlu0 %v452, 96
        %v767 = vpop.permute.xlu0 %766
        %768 = vrot.lane.b32.xlu0 %v453, 96
        %v769 = vpop.permute.xlu0 %768
        %770 = vrot.lane.b32.xlu0 %v454, 96
        %v771 = vpop.permute.xlu0 %770
        %v776 = vsel %vm546, %v754, 0
        %v779 = vsel %vm546, %v756, 0
        %781 = vmatprep.subr.mxu0 0.0
        %782 = vmatpush1.msra.mxu0 %v767
        %783 = vmatprep.subr.mxu0 0.0
        %784 = vmatpush1.msra.mxu0 %v769
        %785 = vmatprep.subr.mxu0 0.0
        %786 = vmatpush1.msra.mxu0 %v771
        %787 = vmatprep.subr.mxu0 0.0
        %788 = vmatpush1.msra.mxu0 0.0
        %789 = vmatprep.subr.mxu0 0.0
        %790 = vmatpush1.msra.mxu0 0.0
        %791 = vmatprep.subr.mxu0 0.0
        %792 = vmatpush1.msra.mxu0 0.0
        %793 = vmatprep.subr.mxu0 0.0
        %794 = vmatpush1.msra.mxu0 0.0
        %795 = vmatprep.subr.mxu0 0.0
        %796 = vmatpush1.msra.mxu0 0.0
        %797 = vmatprep.subr.mxu0 0.0
        %798 = vmatpush1.msra.mxu0 0.0
        %799 = vmatprep.subr.mxu0 0.0
        %800 = vmatpush1.msra.mxu0 0.0
        %801 = vmatprep.subr.mxu0 0.0
        %802 = vmatpush1.msra.mxu0 0.0
        %803 = vmatprep.subr.mxu0 0.0
        %804 = vmatpush1.msra.mxu0 0.0
        %805 = vmatprep.subr.mxu0 0.0
        %806 = vmatpush1.msra.mxu0 0.0
        %807 = vmatprep.subr.mxu0 0.0
        %808 = vmatpush1.msra.mxu0 0.0
        %809 = vmatprep.subr.mxu0 0.0
        %810 = vmatpush1.msra.mxu0 0.0
        %811 = vmatprep.subr.mxu0 0.0
        %812 = vmatpush1.msra.mxu0 0.0
        %813 = vmatprep.subr.mxu0 0.0
        %814 = vmatpush1.msra.mxu0 0.0
        %815 = vmatprep.subr.mxu0 0.0
        %816 = vmatpush1.msra.mxu0 0.0
        %817 = vmatprep.subr.mxu0 0.0
        %818 = vmatpush1.msra.mxu0 0.0
        %819 = vmatprep.subr.mxu0 0.0
        %820 = vmatpush1.msra.mxu0 0.0
        %821 = vmatprep.subr.mxu0 0.0
        %822 = vmatpush1.msra.mxu0 0.0
        %823 = vmatprep.subr.mxu0 0.0
        %824 = vmatpush1.msra.mxu0 0.0
        %825 = vmatprep.subr.mxu0 0.0
        %826 = vmatpush1.msra.mxu0 0.0
        %827 = vmatprep.subr.mxu0 0.0
        %828 = vmatpush1.msra.mxu0 0.0
        %829 = vmatprep.subr.mxu0 0.0
        %830 = vmatpush1.msra.mxu0 0.0
        %831 = vmatprep.subr.mxu0 0.0
        %832 = vmatpush1.msra.mxu0 0.0
        %833 = vmatprep.subr.mxu0 0.0
        %834 = vmatpush1.msra.mxu0 0.0
        %835 = vmatprep.subr.mxu0 0.0
        %836 = vmatpush1.msra.mxu0 0.0
        %837 = vmatprep.subr.mxu0 0.0
        %838 = vmatpush1.msra.mxu0 0.0
        %839 = vmatprep.subr.mxu0 0.0
        %840 = vmatpush1.msra.mxu0 0.0
        %841 = vmatprep.subr.mxu0 0.0
        %842 = vmatpush1.msra.mxu0 0.0
        %843 = vmatprep.subr.mxu0 0.0
        %844 = vmatpush1.msra.mxu0 0.0
        %845 = vmatprep.mubr.f32.mxu0 0.0
        %846 = vmatmul.mubr.f32.gmra.mrb[0].mxu0 %v776
        %v847 = vpop.f32.mrb[0].mxu0
        %v848 = vadd.f32 0.0, %v847
        %v849 = vpop.f32.mrb[0].mxu0
        %850 = vmatprep.mubr.f32.mxu0 0.0
        %851 = vmatmul.mubr.f32.gmra.mrb[0].mxu0 %v779
        %v852 = vpop.f32.mrb[0].mxu0
        %v853 = vadd.f32 0.0, %v852
        %v854 = vpop.f32.mrb[0].mxu0
        %855 = vdwg.mxu0
        %v856 = vrcp.pop %v759
        %v857 = vrcp.pop %v762
        %v858 = vmul.f32 %v848, %v856
        %v859 = vmul.f32 %v853, %v857
        %860 = vrot.lane.b32.xlu0 %v447, 64
        %v861 = vpop.permute.xlu0 %860
        %862 = vrot.lane.b32.xlu0 %v448, 64
        %v863 = vpop.permute.xlu0 %862
        %864 = vrot.lane.b32.xlu0 %v449, 64
        %v865 = vpop.permute.xlu0 %864
        %866 = vrot.lane.b32.xlu0 %v450, 64
        %v867 = vpop.permute.xlu0 %866
        %868 = vrot.lane.b32.xlu0 %v451, 64
        %v869 = vpop.permute.xlu0 %868
        %v870 = vsel %vm455, %v861, 0
        %v872 = vsel %vm455, %v863, 0
        %v874 = vsel %vm455, %v865, 0
        %v876 = vsel %vm455, %v867, 0
        %v878 = vsel %vm455, %v869, 0
        %880 = vmatprep.subr.mxu0 0.0
        %881 = vmatpush1.xpose.msra.mxu0 %v874
        %882 = vmatprep.subr.mxu0 0.0
        %883 = vmatpush1.xpose.msra.mxu0 %v876
        %884 = vmatprep.subr.mxu0 0.0
        %885 = vmatpush1.xpose.msra.mxu0 %v878
        %886 = vmatprep.subr.mxu0 0.0
        %887 = vmatpush1.xpose.msra.mxu0 0.0
        %888 = vmatprep.subr.mxu0 0.0
        %889 = vmatpush1.xpose.msra.mxu0 0.0
        %890 = vmatprep.subr.mxu0 0.0
        %891 = vmatpush1.xpose.msra.mxu0 0.0
        %892 = vmatprep.subr.mxu0 0.0
        %893 = vmatpush1.xpose.msra.mxu0 0.0
        %894 = vmatprep.subr.mxu0 0.0
        %895 = vmatpush1.xpose.msra.mxu0 0.0
        %896 = vmatprep.subr.mxu0 0.0
        %897 = vmatpush1.xpose.msra.mxu0 0.0
        %898 = vmatprep.subr.mxu0 0.0
        %899 = vmatpush1.xpose.msra.mxu0 0.0
        %900 = vmatprep.subr.mxu0 0.0
        %901 = vmatpush1.xpose.msra.mxu0 0.0
        %902 = vmatprep.subr.mxu0 0.0
        %903 = vmatpush1.xpose.msra.mxu0 0.0
        %904 = vmatprep.subr.mxu0 0.0
        %905 = vmatpush1.xpose.msra.mxu0 0.0
        %906 = vmatprep.subr.mxu0 0.0
        %907 = vmatpush1.xpose.msra.mxu0 0.0
        %908 = vmatprep.subr.mxu0 0.0
        %909 = vmatpush1.xpose.msra.mxu0 0.0
        %910 = vmatprep.subr.mxu0 0.0
        %911 = vmatpush1.xpose.msra.mxu0 0.0
        %912 = vmatprep.subr.mxu0 0.0
        %913 = vmatpush1.xpose.msra.mxu0 0.0
        %914 = vmatprep.subr.mxu0 0.0
        %915 = vmatpush1.xpose.msra.mxu0 0.0
        %916 = vmatprep.subr.mxu0 0.0
        %917 = vmatpush1.xpose.msra.mxu0 0.0
        %918 = vmatprep.subr.mxu0 0.0
        %919 = vmatpush1.xpose.msra.mxu0 0.0
        %920 = vmatprep.subr.mxu0 0.0
        %921 = vmatpush1.xpose.msra.mxu0 0.0
        %922 = vmatprep.subr.mxu0 0.0
        %923 = vmatpush1.xpose.msra.mxu0 0.0
        %924 = vmatprep.subr.mxu0 0.0
        %925 = vmatpush1.xpose.msra.mxu0 0.0
        %926 = vmatprep.subr.mxu0 0.0
        %927 = vmatpush1.xpose.msra.mxu0 0.0
        %928 = vmatprep.subr.mxu0 0.0
        %929 = vmatpush1.xpose.msra.mxu0 0.0
        %930 = vmatprep.subr.mxu0 0.0
        %931 = vmatpush1.xpose.msra.mxu0 0.0
        %932 = vmatprep.subr.mxu0 0.0
        %933 = vmatpush1.xpose.msra.mxu0 0.0
        %934 = vmatprep.subr.mxu0 0.0
        %935 = vmatpush1.xpose.msra.mxu0 0.0
        %936 = vmatprep.subr.mxu0 0.0
        %937 = vmatpush1.xpose.msra.mxu0 0.0
        %938 = vmatprep.subr.mxu0 0.0
        %939 = vmatpush1.xpose.msra.mxu0 0.0
        %940 = vmatprep.subr.mxu0 0.0
        %941 = vmatpush1.xpose.msra.mxu0 0.0
        %942 = vmatprep.subr.mxu0 0.0
        %943 = vmatpush1.xpose.msra.mxu0 0.0
        %944 = vmatprep.mubr.f32.mxu0 0.0
        %945 = vmatmul.mubr.f32.gmra.mrb[0].mxu0 %v870
        %v946 = vpop.f32.mrb[0].mxu0
        %v947 = vadd.f32 0.0, %v946
        %v948 = vpop.f32.mrb[0].mxu0
        %949 = vmatprep.mubr.f32.mxu0 0.0
        %950 = vmatmul.mubr.f32.gmra.mrb[0].mxu0 %v872
        %v951 = vpop.f32.mrb[0].mxu0
        %v952 = vadd.f32 0.0, %v951
        %v953 = vpop.f32.mrb[0].mxu0
        %954 = vdwg.mxu0
        %v955 = vsel %vm546, %v947, -inf
        %956 = vmax.xlane.f32.xlu0 %v955
        %v957 = vpop.xlane.xlu0 %956
        %v958 = vsel %vm546, %v952, -inf
        %959 = vmax.xlane.f32.xlu0 %v958
        %v960 = vpop.xlane.xlu0 %959
        %v961 = vsub.f32 %v947, %v957
        %v962 = vsub.f32 %v952, %v960
        %v963 = vmul.f32 %v961, 1.442695
        %v964 = vpow.pop %v963
        %v965 = vmul.f32 %v962, 1.442695
        %v966 = vpow.pop %v965
        %v967 = vsel %vm546, %v964, 0.0
        %968 = vadd.xlane.f32.xlu0 %v967
        %v969 = vpop.xlane.xlu0 %968
        %v970 = vsel %vm546, %v966, 0.0
        %971 = vadd.xlane.f32.xlu0 %v970
        %v972 = vpop.xlane.xlu0 %971
        %973 = vrot.lane.b32.xlu0 %v452, 64
        %v974 = vpop.permute.xlu0 %973
        %975 = vrot.lane.b32.xlu0 %v453, 64
        %v976 = vpop.permute.xlu0 %975
        %977 = vrot.lane.b32.xlu0 %v454, 64
        %v978 = vpop.permute.xlu0 %977
        %v983 = vsel %vm546, %v964, 0
        %v986 = vsel %vm546, %v966, 0
        %988 = vmatprep.subr.mxu0 0.0
        %989 = vmatpush1.msra.mxu0 %v974
        %990 = vmatprep.subr.mxu0 0.0
        %991 = vmatpush1.msra.mxu0 %v976
        %992 = vmatprep.subr.mxu0 0.0
        %993 = vmatpush1.msra.mxu0 %v978
        %994 = vmatprep.subr.mxu0 0.0
        %995 = vmatpush1.msra.mxu0 0.0
        %996 = vmatprep.subr.mxu0 0.0
        %997 = vmatpush1.msra.mxu0 0.0
        %998 = vmatprep.subr.mxu0 0.0
        %999 = vmatpush1.msra.mxu0 0.0
        %1000 = vmatprep.subr.mxu0 0.0
        %1001 = vmatpush1.msra.mxu0 0.0
        %1002 = vmatprep.subr.mxu0 0.0
        %1003 = vmatpush1.msra.mxu0 0.0
        %1004 = vmatprep.subr.mxu0 0.0
        %1005 = vmatpush1.msra.mxu0 0.0
        %1006 = vmatprep.subr.mxu0 0.0
        %1007 = vmatpush1.msra.mxu0 0.0
        %1008 = vmatprep.subr.mxu0 0.0
        %1009 = vmatpush1.msra.mxu0 0.0
        %1010 = vmatprep.subr.mxu0 0.0
        %1011 = vmatpush1.msra.mxu0 0.0
        %1012 = vmatprep.subr.mxu0 0.0
        %1013 = vmatpush1.msra.mxu0 0.0
        %1014 = vmatprep.subr.mxu0 0.0
        %1015 = vmatpush1.msra.mxu0 0.0
        %1016 = vmatprep.subr.mxu0 0.0
        %1017 = vmatpush1.msra.mxu0 0.0
        %1018 = vmatprep.subr.mxu0 0.0
        %1019 = vmatpush1.msra.mxu0 0.0
        %1020 = vmatprep.subr.mxu0 0.0
        %1021 = vmatpush1.msra.mxu0 0.0
        %1022 = vmatprep.subr.mxu0 0.0
        %1023 = vmatpush1.msra.mxu0 0.0
        %1024 = vmatprep.subr.mxu0 0.0
        %1025 = vmatpush1.msra.mxu0 0.0
        %1026 = vmatprep.subr.mxu0 0.0
        %1027 = vmatpush1.msra.mxu0 0.0
        %1028 = vmatprep.subr.mxu0 0.0
        %1029 = vmatpush1.msra.mxu0 0.0
        %1030 = vmatprep.subr.mxu0 0.0
        %1031 = vmatpush1.msra.mxu0 0.0
        %1032 = vmatprep.subr.mxu0 0.0
        %1033 = vmatpush1.msra.mxu0 0.0
        %1034 = vmatprep.subr.mxu0 0.0
        %1035 = vmatpush1.msra.mxu0 0.0
        %1036 = vmatprep.subr.mxu0 0.0
        %1037 = vmatpush1.msra.mxu0 0.0
        %1038 = vmatprep.subr.mxu0 0.0
        %1039 = vmatpush1.msra.mxu0 0.0
        %1040 = vmatprep.subr.mxu0 0.0
        %1041 = vmatpush1.msra.mxu0 0.0
        %1042 = vmatprep.subr.mxu0 0.0
        %1043 = vmatpush1.msra.mxu0 0.0
        %1044 = vmatprep.subr.mxu0 0.0
        %1045 = vmatpush1.msra.mxu0 0.0
        %1046 = vmatprep.subr.mxu0 0.0
        %1047 = vmatpush1.msra.mxu0 0.0
        %1048 = vmatprep.subr.mxu0 0.0
        %1049 = vmatpush1.msra.mxu0 0.0
        %1050 = vmatprep.subr.mxu0 0.0
        %1051 = vmatpush1.msra.mxu0 0.0
        %1052 = vmatprep.mubr.f32.mxu0 0.0
        %1053 = vmatmul.mubr.f32.gmra.mrb[0].mxu0 %v983
        %v1054 = vpop.f32.mrb[0].mxu0
        %v1055 = vadd.f32 0.0, %v1054
        %v1056 = vpop.f32.mrb[0].mxu0
        %1057 = vmatprep.mubr.f32.mxu0 0.0
        %1058 = vmatmul.mubr.f32.gmra.mrb[0].mxu0 %v986
        %v1059 = vpop.f32.mrb[0].mxu0
        %v1060 = vadd.f32 0.0, %v1059
        %v1061 = vpop.f32.mrb[0].mxu0
        %1062 = vdwg.mxu0
        %v1063 = vrcp.pop %v969
        %v1064 = vrcp.pop %v972
        %v1065 = vmul.f32 %v1055, %v1063
        %v1066 = vmul.f32 %v1060, %v1064
        %1067 = vrot.lane.b32.xlu0 %v447, 32
        %v1068 = vpop.permute.xlu0 %1067
        %1069 = vrot.lane.b32.xlu0 %v448, 32
        %v1070 = vpop.permute.xlu0 %1069
        %1071 = vrot.lane.b32.xlu0 %v449, 32
        %v1072 = vpop.permute.xlu0 %1071
        %1073 = vrot.lane.b32.xlu0 %v450, 32
        %v1074 = vpop.permute.xlu0 %1073
        %1075 = vrot.lane.b32.xlu0 %v451, 32
        %v1076 = vpop.permute.xlu0 %1075
        %v1077 = vsel %vm455, %v1068, 0
        %v1079 = vsel %vm455, %v1070, 0
        %v1081 = vsel %vm455, %v1072, 0
        %v1083 = vsel %vm455, %v1074, 0
        %v1085 = vsel %vm455, %v1076, 0
        %1087 = vmatprep.subr.mxu0 0.0
        %1088 = vmatpush1.xpose.msra.mxu0 %v1081
        %1089 = vmatprep.subr.mxu0 0.0
        %1090 = vmatpush1.xpose.msra.mxu0 %v1083
        %1091 = vmatprep.subr.mxu0 0.0
        %1092 = vmatpush1.xpose.msra.mxu0 %v1085
        %1093 = vmatprep.subr.mxu0 0.0
        %1094 = vmatpush1.xpose.msra.mxu0 0.0
        %1095 = vmatprep.subr.mxu0 0.0
        %1096 = vmatpush1.xpose.msra.mxu0 0.0
        %1097 = vmatprep.subr.mxu0 0.0
        %1098 = vmatpush1.xpose.msra.mxu0 0.0
        %1099 = vmatprep.subr.mxu0 0.0
        %1100 = vmatpush1.xpose.msra.mxu0 0.0
        %1101 = vmatprep.subr.mxu0 0.0
        %1102 = vmatpush1.xpose.msra.mxu0 0.0
        %1103 = vmatprep.subr.mxu0 0.0
        %1104 = vmatpush1.xpose.msra.mxu0 0.0
        %1105 = vmatprep.subr.mxu0 0.0
        %1106 = vmatpush1.xpose.msra.mxu0 0.0
        %1107 = vmatprep.subr.mxu0 0.0
        %1108 = vmatpush1.xpose.msra.mxu0 0.0
        %1109 = vmatprep.subr.mxu0 0.0
        %1110 = vmatpush1.xpose.msra.mxu0 0.0
        %1111 = vmatprep.subr.mxu0 0.0
        %1112 = vmatpush1.xpose.msra.mxu0 0.0
        %1113 = vmatprep.subr.mxu0 0.0
        %1114 = vmatpush1.xpose.msra.mxu0 0.0
        %1115 = vmatprep.subr.mxu0 0.0
        %1116 = vmatpush1.xpose.msra.mxu0 0.0
        %1117 = vmatprep.subr.mxu0 0.0
        %1118 = vmatpush1.xpose.msra.mxu0 0.0
        %1119 = vmatprep.subr.mxu0 0.0
        %1120 = vmatpush1.xpose.msra.mxu0 0.0
        %1121 = vmatprep.subr.mxu0 0.0
        %1122 = vmatpush1.xpose.msra.mxu0 0.0
        %1123 = vmatprep.subr.mxu0 0.0
        %1124 = vmatpush1.xpose.msra.mxu0 0.0
        %1125 = vmatprep.subr.mxu0 0.0
        %1126 = vmatpush1.xpose.msra.mxu0 0.0
        %1127 = vmatprep.subr.mxu0 0.0
        %1128 = vmatpush1.xpose.msra.mxu0 0.0
        %1129 = vmatprep.subr.mxu0 0.0
        %1130 = vmatpush1.xpose.msra.mxu0 0.0
        %1131 = vmatprep.subr.mxu0 0.0
        %1132 = vmatpush1.xpose.msra.mxu0 0.0
        %1133 = vmatprep.subr.mxu0 0.0
        %1134 = vmatpush1.xpose.msra.mxu0 0.0
        %1135 = vmatprep.subr.mxu0 0.0
        %1136 = vmatpush1.xpose.msra.mxu0 0.0
        %1137 = vmatprep.subr.mxu0 0.0
        %1138 = vmatpush1.xpose.msra.mxu0 0.0
        %1139 = vmatprep.subr.mxu0 0.0
        %1140 = vmatpush1.xpose.msra.mxu0 0.0
        %1141 = vmatprep.subr.mxu0 0.0
        %1142 = vmatpush1.xpose.msra.mxu0 0.0
        %1143 = vmatprep.subr.mxu0 0.0
        %1144 = vmatpush1.xpose.msra.mxu0 0.0
        %1145 = vmatprep.subr.mxu0 0.0
        %1146 = vmatpush1.xpose.msra.mxu0 0.0
        %1147 = vmatprep.subr.mxu0 0.0
        %1148 = vmatpush1.xpose.msra.mxu0 0.0
        %1149 = vmatprep.subr.mxu0 0.0
        %1150 = vmatpush1.xpose.msra.mxu0 0.0
        %1151 = vmatprep.mubr.f32.mxu0 0.0
        %1152 = vmatmul.mubr.f32.gmra.mrb[0].mxu0 %v1077
        %v1153 = vpop.f32.mrb[0].mxu0
        %v1154 = vadd.f32 0.0, %v1153
        %v1155 = vpop.f32.mrb[0].mxu0
        %1156 = vmatprep.mubr.f32.mxu0 0.0
        %1157 = vmatmul.mubr.f32.gmra.mrb[0].mxu0 %v1079
        %v1158 = vpop.f32.mrb[0].mxu0
        %v1159 = vadd.f32 0.0, %v1158
        %v1160 = vpop.f32.mrb[0].mxu0
        %1161 = vdwg.mxu0
        %v1162 = vsel %vm546, %v1154, -inf
        %1163 = vmax.xlane.f32.xlu0 %v1162
        %v1164 = vpop.xlane.xlu0 %1163
        %v1165 = vsel %vm546, %v1159, -inf
        %1166 = vmax.xlane.f32.xlu0 %v1165
        %v1167 = vpop.xlane.xlu0 %1166
        %v1168 = vsub.f32 %v1154, %v1164
        %v1169 = vsub.f32 %v1159, %v1167
        %v1170 = vmul.f32 %v1168, 1.442695
        %v1171 = vpow.pop %v1170
        %v1172 = vmul.f32 %v1169, 1.442695
        %v1173 = vpow.pop %v1172
        %v1174 = vsel %vm546, %v1171, 0.0
        %1175 = vadd.xlane.f32.xlu0 %v1174
        %v1176 = vpop.xlane.xlu0 %1175
        %v1177 = vsel %vm546, %v1173, 0.0
        %1178 = vadd.xlane.f32.xlu0 %v1177
        %v1179 = vpop.xlane.xlu0 %1178
        %1180 = vrot.lane.b32.xlu0 %v452, 32
        %v1181 = vpop.permute.xlu0 %1180
        %1182 = vrot.lane.b32.xlu0 %v453, 32
        %v1183 = vpop.permute.xlu0 %1182
        %1184 = vrot.lane.b32.xlu0 %v454, 32
        %v1185 = vpop.permute.xlu0 %1184
        %v1190 = vsel %vm546, %v1171, 0
        %v1193 = vsel %vm546, %v1173, 0
        %1195 = vmatprep.subr.mxu0 0.0
        %1196 = vmatpush1.msra.mxu0 %v1181
        %1197 = vmatprep.subr.mxu0 0.0
        %1198 = vmatpush1.msra.mxu0 %v1183
        %1199 = vmatprep.subr.mxu0 0.0
        %1200 = vmatpush1.msra.mxu0 %v1185
        %1201 = vmatprep.subr.mxu0 0.0
        %1202 = vmatpush1.msra.mxu0 0.0
        %1203 = vmatprep.subr.mxu0 0.0
        %1204 = vmatpush1.msra.mxu0 0.0
        %1205 = vmatprep.subr.mxu0 0.0
        %1206 = vmatpush1.msra.mxu0 0.0
        %1207 = vmatprep.subr.mxu0 0.0
        %1208 = vmatpush1.msra.mxu0 0.0
        %1209 = vmatprep.subr.mxu0 0.0
        %1210 = vmatpush1.msra.mxu0 0.0
        %1211 = vmatprep.subr.mxu0 0.0
        %1212 = vmatpush1.msra.mxu0 0.0
        %1213 = vmatprep.subr.mxu0 0.0
        %1214 = vmatpush1.msra.mxu0 0.0
        %1215 = vmatprep.subr.mxu0 0.0
        %1216 = vmatpush1.msra.mxu0 0.0
        %1217 = vmatprep.subr.mxu0 0.0
        %1218 = vmatpush1.msra.mxu0 0.0
        %1219 = vmatprep.subr.mxu0 0.0
        %1220 = vmatpush1.msra.mxu0 0.0
        %1221 = vmatprep.subr.mxu0 0.0
        %1222 = vmatpush1.msra.mxu0 0.0
        %1223 = vmatprep.subr.mxu0 0.0
        %1224 = vmatpush1.msra.mxu0 0.0
        %1225 = vmatprep.subr.mxu0 0.0
        %1226 = vmatpush1.msra.mxu0 0.0
        %1227 = vmatprep.subr.mxu0 0.0
        %1228 = vmatpush1.msra.mxu0 0.0
        %1229 = vmatprep.subr.mxu0 0.0
        %1230 = vmatpush1.msra.mxu0 0.0
        %1231 = vmatprep.subr.mxu0 0.0
        %1232 = vmatpush1.msra.mxu0 0.0
        %1233 = vmatprep.subr.mxu0 0.0
        %1234 = vmatpush1.msra.mxu0 0.0
        %1235 = vmatprep.subr.mxu0 0.0
        %1236 = vmatpush1.msra.mxu0 0.0
        %1237 = vmatprep.subr.mxu0 0.0
        %1238 = vmatpush1.msra.mxu0 0.0
        %1239 = vmatprep.subr.mxu0 0.0
        %1240 = vmatpush1.msra.mxu0 0.0
        %1241 = vmatprep.subr.mxu0 0.0
        %1242 = vmatpush1.msra.mxu0 0.0
        %1243 = vmatprep.subr.mxu0 0.0
        %1244 = vmatpush1.msra.mxu0 0.0
        %1245 = vmatprep.subr.mxu0 0.0
        %1246 = vmatpush1.msra.mxu0 0.0
        %1247 = vmatprep.subr.mxu0 0.0
        %1248 = vmatpush1.msra.mxu0 0.0
        %1249 = vmatprep.subr.mxu0 0.0
        %1250 = vmatpush1.msra.mxu0 0.0
        %1251 = vmatprep.subr.mxu0 0.0
        %1252 = vmatpush1.msra.mxu0 0.0
        %1253 = vmatprep.subr.mxu0 0.0
        %1254 = vmatpush1.msra.mxu0 0.0
        %1255 = vmatprep.subr.mxu0 0.0
        %1256 = vmatpush1.msra.mxu0 0.0
        %1257 = vmatprep.subr.mxu0 0.0
        %1258 = vmatpush1.msra.mxu0 0.0
        %1259 = vmatprep.mubr.f32.mxu0 0.0
        %1260 = vmatmul.mubr.f32.gmra.mrb[0].mxu0 %v1190
        %v1261 = vpop.f32.mrb[0].mxu0
        %v1262 = vadd.f32 0.0, %v1261
        %v1263 = vpop.f32.mrb[0].mxu0
        %1264 = vmatprep.mubr.f32.mxu0 0.0
        %1265 = vmatmul.mubr.f32.gmra.mrb[0].mxu0 %v1193
        %v1266 = vpop.f32.mrb[0].mxu0
        %v1267 = vadd.f32 0.0, %v1266
        %v1268 = vpop.f32.mrb[0].mxu0
        %1269 = vdwg.mxu0
        %v1270 = vrcp.pop %v1176
        %v1271 = vrcp.pop %v1179
        %v1272 = vmul.f32 %v1262, %v1270
        %v1273 = vmul.f32 %v1267, %v1271
        %1276 = vrot.lane.b32.xlu0 %v858, 32
        %v1277 = vpop.permute.xlu0 %1276
        %1278 = vrot.lane.b32.xlu0 %v859, 32
        %v1279 = vpop.permute.xlu0 %1278
        %1284 = vrot.lane.b32.xlu0 %v1065, 64
        %v1285 = vpop.permute.xlu0 %1284
        %1286 = vrot.lane.b32.xlu0 %v1066, 64
        %v1287 = vpop.permute.xlu0 %1286
        %1292 = vrot.lane.b32.xlu0 %v1272, 96
        %v1293 = vpop.permute.xlu0 %1292
        %1294 = vrot.lane.b32.xlu0 %v1273, 96
        %v1295 = vpop.permute.xlu0 %1294
        %v1298 = vsel %vm455, %v648, %v1277
        %v1299 = vsel %vm455, %v649, %v1279
        %vm1300 = vcmask 523264
        %v1301 = vsel %vm1300, %v1298, %v1285
        %v1302 = vsel %vm1300, %v1299, %v1287
        %vm1303 = vcmask 785408
        %v1304 = vsel %vm1303, %v1301, %v1293
        %v1305 = vsel %vm1303, %v1302, %v1295
        %1306 = vst [vmem:[%s443] sm:$0xff] %v1304
        %1307 = vst [vmem:[%s443 + $0x8] sm:$0xff] %v1305
        %s1308 = smul.u32 2, %s19
        %p1309 = scmp.lt.s32.totalorder %s18, 1
        %s1310 = scalar_select %p1309, %s18, 1
        %p1311 = scmp.lt.s32.totalorder %s1308, 1
        %s1312 = scalar_select %p1311, %s1308, 1
        %s1313 = smul.addr %s1310, 2
        %s1314 = sadd.s32 %s1312, %s1313
        %s1315 = smul.addr %s1314, 8
        %s1316 = scalar_lea.vmem %s3, %s1315
        // Predicated region
        $region161: #{attention_vk_forward.4} parent=147 // pred_check
          %p1317 = pneg %p126
        $region162: #{attention_vk_forward.4} parent=147 // pred_check_branch
          %1319 = sbr.rel (%p1317) target = $region164
        $region163: #{attention_vk_forward.4} parent=147 // pred_region
          %s1320 = smul.u32 2, %s19
        $region164: #{attention_vk_forward.4} parent=147 // pred_fallthru
          _
      $region148: #{attention_vk_forward.4} parent=5 // pred_fallthru
        _
      %p1321 = scmp.le.s32.totalorder 2, %s9
      // Predicated region
      $region165: #{attention_vk_forward.4} parent=5 // pred_check
        %p1322 = pneg %p1321
      $region166: #{attention_vk_forward.4} parent=5 // pred_check_branch
        %1324 = sbr.rel (%p1322) target = $region168
      $region167: #{attention_vk_forward.4} parent=5 // pred_region
        %s1325 = ssub.s32 %s9, 2
        // Predicated region
        $region169: #{attention_vk_forward.4} parent=167 // pred_check
          %p1326 = pneg %p132
        $region170: #{attention_vk_forward.4} parent=167 // pred_check_branch
          %1328 = sbr.rel (%p1326) target = $region172
        $region171: #{attention_vk_forward.4} parent=167 // pred_region
          %s1329 = smul.u32 2, %s21
          %p1330 = scmp.lt.s32.totalorder %s20, 1
          %s1331 = scalar_select %p1330, %s20, 1
          %p1332 = scmp.lt.s32.totalorder %s1329, 1
          %s1333 = scalar_select %p1332, %s1329, 1
          %s1334 = smul.addr %s1331, 2
          %s1335 = sadd.s32 %s1333, %s1334
          %s1336 = smul.addr %s1335, 8
          %s1337 = scalar_lea.vmem %s3, %s1336
        $region172: #{attention_vk_forward.4} parent=167 // pred_fallthru
          _
      $region168: #{attention_vk_forward.4} parent=5 // pred_fallthru
        _
    $region6: #{attention_vk_forward.4} parent=1 // loop_footer
      %s13 = sadd.s32 1, %s9
    $region7: #{attention_vk_forward.4} parent=1 // loop_footer_branch
      %8 = sbr.rel target = $region3
    $region8: #{attention_vk_forward.4} parent=1 // loop_exit
      _

</llo_original>
